<compile_context>
chip_gen: v7x
topology: tpu7x:2x2x1
jax: 0.10.0
libtpu: 0.0.40
codegen_flags: <defaults>
</compile_context>

<pallas_src>
import numpy as np
import jax
import jax.numpy as jnp
from jax.experimental import pallas as pl
from jax.experimental.pallas import tpu as pltpu

# ----------------------- model sizes: LNO1d(width=4, modes=8) -----------------------
B = 2      # batch
S = 16     # spatial / time points (== len(grid_x_train) == x.size(-1))
C = 4      # width
M = 8      # modes
H = 128    # fc1 hidden


# --------------------------------- Pallas kernel ------------------------------------
def lno1d_kernel(x_ref, wf_ref, bf_ref, w2b_ref, o_ref):
    """Entire LNO1d forward in one invocation.

    x_ref   : (B, S)        raw input values (grid channel folded into bf offline)
    wf_ref  : (S, S*H) bf16 folded operator  fc0 -> PR spectral -> conv1x1 -> fc1
    bf_ref  : (1, S*H) f32  folded bias of the same chain (incl. gridx, b0, conv_b, b1)
    w2b_ref : (2, H)   f32  row 0 = fc2 weight, row 1 = fc2 bias (broadcast across lanes)
    o_ref   : (B, S)   f32  output
    """
    s_len = x_ref.shape[1]          # S
    hdim = w2b_ref.shape[1]         # H (= 128, one full lane group)

    # fc0 + spectral + 1x1 conv + fc1, all folded into one dense matmul (K = S = 16).
    x = x_ref[...].astype(jnp.bfloat16)                                   # (B, S)
    pre = jnp.dot(x, wf_ref[...], preferred_element_type=jnp.float32)     # (B, S*H)
    pre = pre + bf_ref[...]
    z = jnp.sin(pre)                                                      # (B, S*H)

    # fc2: per-position H->1.  Each position s owns exactly one 128-lane group of z, so this
    # is a VPU multiply + lane reduce per aligned vreg slice (no zero-inflated W2big, no MXU).
    w2 = w2b_ref[0:1, :]            # (1, H)
    b2 = w2b_ref[1:2, 0:1]          # (1, 1)
    for s in range(s_len):          # static, unrolled (16 iterations)
        zs = z[:, s * hdim:(s + 1) * hdim]                                # (B, H), 128-aligned
        o_ref[:, s:s + 1] = jnp.sum(zs * w2, axis=-1, keepdims=True) + b2


# ------------------------------ parameters & operators ------------------------------
def init_params(key):
    ks = jax.random.split(key, 12)
    scale = 1.0 / (C * C)
    p = {}
    p["fc0_w"] = jax.random.normal(ks[0], (2, C), jnp.float32) * 0.25     # stored as (in, out)
    p["fc0_b"] = jax.random.normal(ks[1], (C,), jnp.float32) * 0.1
    # PR complex weights; torch uses scale*rand(cfloat).  Poles bounded away from 0 for a
    # well-conditioned 1/(lambda - pole).
    pr = jax.random.uniform(ks[2], (C, C, M), jnp.float32, 0.3, 1.0)
    pi = jax.random.uniform(ks[3], (C, C, M), jnp.float32, 0.3, 1.0)
    p["pole"] = (scale * (pr + 1j * pi)).astype(jnp.complex64)
    rr = jax.random.uniform(ks[4], (C, C, M), jnp.float32)
    ri = jax.random.uniform(ks[5], (C, C, M), jnp.float32)
    p["residue"] = (scale * (rr + 1j * ri)).astype(jnp.complex64)
    p["conv_w"] = jax.random.normal(ks[6], (C, C), jnp.float32) * 0.5     # (out, in), k=1
    p["conv_b"] = jax.random.normal(ks[7], (C,), jnp.float32) * 0.1
    p["fc1_w"] = jax.random.normal(ks[8], (C, H), jnp.float32) * 0.02     # stored as (in, out)
    p["fc1_b"] = jax.random.normal(ks[9], (H,), jnp.float32) * 0.1
    p["fc2_w"] = jax.random.normal(ks[10], (H, 1), jnp.float32) * (1.0 / np.sqrt(H))
    p["fc2_b"] = jax.random.normal(ks[11], (1,), jnp.float32) * 0.1
    return p


def build_operators(params, t):
    """Fold ALL parameters into dense, de-inflated operators (float64 numpy, exact)."""
    t = np.asarray(t, np.float64)
    dt = float(t[1] - t[0])
    pole = np.asarray(params["pole"], np.complex128)        # (C, C, M)  [i, o, k]
    residue = np.asarray(params["residue"], np.complex128)
    lam = 2j * np.pi * np.fft.fftfreq(S, d=dt)               # (S,) fft-bin frequencies
    Hw = residue[None] / (lam[:, None, None, None] - pole[None])   # (S, C, C, M) [f,i,o,k]
    G = Hw.sum(-1)                                           # (S, C, C) [f, i, o]
    f = np.arange(S)
    F = np.exp(-2j * np.pi * np.outer(f, f) / S)             # DFT,  F[f, s]
    Finv = np.exp(+2j * np.pi * np.outer(f, f) / S) / S      # IDFT, Finv[s, f]
    eC, eS = np.eye(C), np.eye(S)
    # alpha[b, f*C+i] = sum_s F[f,s] * h[b, s*C+i]
    A = np.einsum("fs,ij->sifj", F, eC).reshape(S * C, S * C)
    # res1[b, f*C+o] = sum_i alpha[b, f*C+i] * G[f,i,o]
    M1 = np.einsum("fio,fg->figo", G, eS).reshape(S * C, S * C)
    # x1[b, s*C+o]  = Re(sum_f Finv[s,f] * res1[b, f*C+o])
    M2 = np.einsum("sf,oO->fosO", Finv, eC).reshape(S * C, S * C)
    # res2[b, c*M+k] = sum_{f,i} alpha[b, f*C+i] * (-Hw[f,i,c,k])
    M3 = (-Hw).reshape(S * C, C * M)
    # x2[b, z*C+o]  = Re(sum_{c,k} res2[b, c*M+k] * exp(pole[c,o,k]*t[z])) / S
    E = np.exp(pole[:, :, :, None] * t[None, None, None, :]) / S    # (C, C, M, S) [c,o,k,z]
    M4 = E.transpose(0, 2, 3, 1).reshape(C * M, S * C)
    # Compose the whole spectral chain (h is real -> only the real part survives):
    T = (A @ (M1 @ M2 + M3 @ M4)).real                               # (S*C, S*C)
    # w0 1x1 conv as block-diagonal, added to the spectral operator.
    Wc = np.asarray(params["conv_w"], np.float64)                    # (out, in)
    Wcbig = np.einsum("oi,sS->siSo", Wc, eS).reshape(S * C, S * C)
    TV = T + Wcbig
    bc = np.tile(np.asarray(params["conv_b"], np.float64), S)        # (S*C,)

    # fc0 with the CONSTANT gridx channel folded into the bias (review item: no grid tensor,
    # no wrapper concat, x comes in as a plain (B, S) slab).
    W0 = np.asarray(params["fc0_w"], np.float64)                     # (2, C): row 0 -> x, row 1 -> grid
    b0 = np.asarray(params["fc0_b"], np.float64)
    gridx = np.linspace(0.0, 1.0, S)
    W0x = np.einsum("c,sS->sSc", W0[0], eS).reshape(S, S * C)        # x-only part, (S, S*C)
    b0big = (gridx[:, None] * W0[1][None, :] + b0[None, :]).reshape(S * C)

    # Compose fc0 with the spectral+conv operator.
    WA = W0x @ TV                                                    # (S, S*C)
    bA = b0big @ TV + bc                                             # (S*C,)

    # Compose with fc1 (block-diagonal per-position C->H).  The *composition* is dense,
    # so the shipped weight has no zero padding: (S, S*H) = (16, 2048).
    W1 = np.asarray(params["fc1_w"], np.float64)                     # (C, H)
    b1 = np.asarray(params["fc1_b"], np.float64)
    W1big = np.einsum("ch,sS->scSh", W1, eS).reshape(S * C, S * H)   # offline temp only
    WF = WA @ W1big                                                  # (S, S*H) dense
    bF = bA @ W1big + np.tile(b1, S)                                 # (S*H,)

    # fc2 weight + bias packed into one (2, H) slab.
    W2 = np.asarray(params["fc2_w"], np.float64)[:, 0]               # (H,)
    b2 = float(np.asarray(params["fc2_b"])[0])
    w2b = np.stack([W2, np.full(H, b2, np.float64)], axis=0)         # (2, H)

    return {
        "WF": jnp.asarray(np.asarray(WF, np.float32), jnp.bfloat16),   # ~68 KB, MXU-native
        "bF": jnp.asarray(np.asarray(bF, np.float32)[None, :], jnp.float32),  # (1, S*H)
        "w2b": jnp.asarray(np.asarray(w2b, np.float32), jnp.float32),
    }


# -------------------------------- forward (Pallas) ----------------------------------
def lno1d_forward(x, ops):
    Bx, Sx, _ = x.shape
    x2d = x.reshape(Bx, Sx)   # drop trailing 1: pure bitcast, no wrapper data movement

    vmem = pl.BlockSpec(memory_space=pltpu.MemorySpace.VMEM)
    flops = 2 * Bx * Sx * (Sx * H) + 2 * Bx * Sx * H
    bytes_accessed = (x2d.size * 4 + ops["WF"].size * 2 + ops["bF"].size * 4
                      + ops["w2b"].size * 4 + Bx * Sx * 4)

    out = pl.pallas_call(
        lno1d_kernel,
        out_shape=jax.ShapeDtypeStruct((Bx, Sx), jnp.float32),
        in_specs=[vmem] * 4,
        out_specs=vmem,
        cost_estimate=pl.CostEstimate(flops=flops, transcendentals=Bx * Sx * H,
                                      bytes_accessed=int(bytes_accessed)),
    )(x2d, ops["WF"], ops["bF"], ops["w2b"])
    return out.reshape(Bx, Sx, 1)


# ------------------------------ pure-JAX reference -----------------------------------
def reference_forward(x, params, t):
    Bx, Sx, _ = x.shape
    dt = float(t[1] - t[0])
    gridx = jnp.broadcast_to(
        jnp.linspace(0.0, 1.0, Sx, dtype=jnp.float32).reshape(1, Sx, 1), (Bx, Sx, 1))
    xg = jnp.concatenate([x, gridx], axis=-1)
    h = xg @ params["fc0_w"] + params["fc0_b"]                 # fc0
    hp = jnp.transpose(h, (0, 2, 1))                            # (B, C, S)
    pole, residue = params["pole"], params["residue"]
    alpha = jnp.fft.fft(hp, axis=-1)
    lam = (2j * jnp.pi * jnp.fft.fftfreq(Sx, d=dt)).astype(jnp.complex64)
    Hw = residue / (lam.reshape(Sx, 1, 1, 1) - pole)            # (S, C, C, M)
    out_res1 = jnp.einsum("bix,xiok->box", alpha, Hw)
    out_res2 = jnp.einsum("bix,xiok->bok", alpha, -Hw)
    x1 = jnp.real(jnp.fft.ifft(out_res1, n=Sx, axis=-1))
    tt = jnp.asarray(t, jnp.complex64).reshape(1, -1)
    term2 = jnp.exp(jnp.einsum("iok,az->iokz", pole, tt))
    x2 = jnp.real(jnp.einsum("bik,iokz->boz", out_res2, term2)) / Sx
    y = x1 + x2
    y = y + jnp.einsum("oi,bis->bos", params["conv_w"], hp) + params["conv_b"].reshape(1, C, 1)
    y = jnp.transpose(y, (0, 2, 1))
    z = jnp.sin(y @ params["fc1_w"] + params["fc1_b"])
    return z @ params["fc2_w"] + params["fc2_b"]


# --------------------------------------- main ----------------------------------------
if __name__ == "__main__":
    key = jax.random.PRNGKey(0)
    kx, kp = jax.random.split(key)
    x = jax.random.normal(kx, (B, S, 1), jnp.float32)
    params = init_params(kp)
    t = np.linspace(0.0, 1.0, S)      # TODO(synk): synthetic stand-in for grid_x_train
    ops = build_operators(params, t)

    fwd = jax.jit(lambda xx: lno1d_forward(xx, ops))
    out = jax.block_until_ready(fwd(x))

    with jax.default_matmul_precision("highest"):
        ref = jax.block_until_ready(reference_forward(x, params, jnp.asarray(t, jnp.float32)))
    np.testing.assert_allclose(np.asarray(out), np.asarray(ref), rtol=3e-2, atol=3e-2)
    assert out.shape == (B, S, 1) and out.dtype == jnp.float32
    print("KERNEL_OK")
</pallas_src>

<mosaic_0001>
module attributes {stable_mosaic.version = 11 : i64} {
  func.func @lno1d_kernel(%arg0: memref<2x16xf32, #tpu.memory_space<vmem>>, %arg1: memref<16x2048xbf16, #tpu.memory_space<vmem>>, %arg2: memref<1x2048xf32, #tpu.memory_space<vmem>>, %arg3: memref<2x128xf32, #tpu.memory_space<vmem>>, %arg4: memref<2x16xf32, #tpu.memory_space<vmem>>) attributes {dimension_semantics = [], scalar_prefetch = 0 : i64, scratch_operands = 0 : i64, tpu.core_type = #tpu.core_type<tc>} {
    %c0 = arith.constant 0 : index
    %c0_0 = arith.constant 0 : index
    %0 = vector.load %arg0[%c0, %c0_0] : memref<2x16xf32, #tpu.memory_space<vmem>>, vector<2x16xf32>
    %1 = arith.truncf %0 : vector<2x16xf32> to vector<2x16xbf16>
    %c0_1 = arith.constant 0 : index
    %c0_2 = arith.constant 0 : index
    %2 = vector.load %arg1[%c0_1, %c0_2] : memref<16x2048xbf16, #tpu.memory_space<vmem>>, vector<16x2048xbf16>
    %cst = arith.constant dense<0.000000e+00> : vector<2x2048xf32>
    %3 = tpu.matmul %1, %2, %cst {dimension_numbers = #tpu.dot_dimension_numbers<[1], [0], [0], [1], [0, 0, 1, 1], [], []>} : vector<2x16xbf16>, vector<16x2048xbf16>, vector<2x2048xf32> -> vector<2x2048xf32>
    %c0_3 = arith.constant 0 : index
    %c0_4 = arith.constant 0 : index
    %4 = vector.load %arg2[%c0_3, %c0_4] : memref<1x2048xf32, #tpu.memory_space<vmem>>, vector<1x2048xf32>
    %5 = vector.broadcast %4 : vector<1x2048xf32> to vector<2x2048xf32>
    %6 = arith.addf %3, %5 : vector<2x2048xf32>
    %7 = math.sin %6 : vector<2x2048xf32>
    %c0_5 = arith.constant 0 : index
    %c0_6 = arith.constant 0 : index
    %8 = vector.load %arg3[%c0_5, %c0_6] : memref<2x128xf32, #tpu.memory_space<vmem>>, vector<1x128xf32>
    %c1 = arith.constant 1 : index
    %c0_7 = arith.constant 0 : index
    %9 = vector.load %arg3[%c1, %c0_7] : memref<2x128xf32, #tpu.memory_space<vmem>>, vector<1x1xf32>
    %10 = vector.extract_strided_slice %7 {offsets = [0, 0], sizes = [2, 128], strides = [1, 1]} : vector<2x2048xf32> to vector<2x128xf32>
    %11 = vector.broadcast %8 : vector<1x128xf32> to vector<2x128xf32>
    %12 = arith.mulf %10, %11 : vector<2x128xf32>
    %cst_8 = arith.constant dense<0.000000e+00> : vector<2xf32>
    %13 = vector.multi_reduction <add>, %12, %cst_8 [1] : vector<2x128xf32> to vector<2xf32>
    %14 = vector.shape_cast %13 : vector<2xf32> to vector<2x1xf32>
    %15 = vector.broadcast %9 : vector<1x1xf32> to vector<2x1xf32>
    %16 = arith.addf %14, %15 : vector<2x1xf32>
    %c0_9 = arith.constant 0 : index
    %c0_10 = arith.constant 0 : index
    %17 = vector.load %arg4[%c0_9, %c0_10] : memref<2x16xf32, #tpu.memory_space<vmem>>, vector<2x1xf32>
    tpu.vector_store %arg4[%c0_9, %c0_10], %16 {strides = array<i32>} : memref<2x16xf32, #tpu.memory_space<vmem>>, vector<2x1xf32>,
    %18 = vector.extract_strided_slice %7 {offsets = [0, 128], sizes = [2, 128], strides = [1, 1]} : vector<2x2048xf32> to vector<2x128xf32>
    %19 = vector.broadcast %8 : vector<1x128xf32> to vector<2x128xf32>
    %20 = arith.mulf %18, %19 : vector<2x128xf32>
    %cst_11 = arith.constant dense<0.000000e+00> : vector<2xf32>
    %21 = vector.multi_reduction <add>, %20, %cst_11 [1] : vector<2x128xf32> to vector<2xf32>
    %22 = vector.shape_cast %21 : vector<2xf32> to vector<2x1xf32>
    %23 = vector.broadcast %9 : vector<1x1xf32> to vector<2x1xf32>
    %24 = arith.addf %22, %23 : vector<2x1xf32>
    %c0_12 = arith.constant 0 : index
    %c1_13 = arith.constant 1 : index
    %25 = vector.load %arg4[%c0_12, %c1_13] : memref<2x16xf32, #tpu.memory_space<vmem>>, vector<2x1xf32>
    tpu.vector_store %arg4[%c0_12, %c1_13], %24 {strides = array<i32>} : memref<2x16xf32, #tpu.memory_space<vmem>>, vector<2x1xf32>,
    %26 = vector.extract_strided_slice %7 {offsets = [0, 256], sizes = [2, 128], strides = [1, 1]} : vector<2x2048xf32> to vector<2x128xf32>
    %27 = vector.broadcast %8 : vector<1x128xf32> to vector<2x128xf32>
    %28 = arith.mulf %26, %27 : vector<2x128xf32>
    %cst_14 = arith.constant dense<0.000000e+00> : vector<2xf32>
    %29 = vector.multi_reduction <add>, %28, %cst_14 [1] : vector<2x128xf32> to vector<2xf32>
    %30 = vector.shape_cast %29 : vector<2xf32> to vector<2x1xf32>
    %31 = vector.broadcast %9 : vector<1x1xf32> to vector<2x1xf32>
    %32 = arith.addf %30, %31 : vector<2x1xf32>
    %c0_15 = arith.constant 0 : index
    %c2 = arith.constant 2 : index
    %33 = vector.load %arg4[%c0_15, %c2] : memref<2x16xf32, #tpu.memory_space<vmem>>, vector<2x1xf32>
    tpu.vector_store %arg4[%c0_15, %c2], %32 {strides = array<i32>} : memref<2x16xf32, #tpu.memory_space<vmem>>, vector<2x1xf32>,
    %34 = vector.extract_strided_slice %7 {offsets = [0, 384], sizes = [2, 128], strides = [1, 1]} : vector<2x2048xf32> to vector<2x128xf32>
    %35 = vector.broadcast %8 : vector<1x128xf32> to vector<2x128xf32>
    %36 = arith.mulf %34, %35 : vector<2x128xf32>
    %cst_16 = arith.constant dense<0.000000e+00> : vector<2xf32>
    %37 = vector.multi_reduction <add>, %36, %cst_16 [1] : vector<2x128xf32> to vector<2xf32>
    %38 = vector.shape_cast %37 : vector<2xf32> to vector<2x1xf32>
    %39 = vector.broadcast %9 : vector<1x1xf32> to vector<2x1xf32>
    %40 = arith.addf %38, %39 : vector<2x1xf32>
    %c0_17 = arith.constant 0 : index
    %c3 = arith.constant 3 : index
    %41 = vector.load %arg4[%c0_17, %c3] : memref<2x16xf32, #tpu.memory_space<vmem>>, vector<2x1xf32>
    tpu.vector_store %arg4[%c0_17, %c3], %40 {strides = array<i32>} : memref<2x16xf32, #tpu.memory_space<vmem>>, vector<2x1xf32>,
    %42 = vector.extract_strided_slice %7 {offsets = [0, 512], sizes = [2, 128], strides = [1, 1]} : vector<2x2048xf32> to vector<2x128xf32>
    %43 = vector.broadcast %8 : vector<1x128xf32> to vector<2x128xf32>
    %44 = arith.mulf %42, %43 : vector<2x128xf32>
    %cst_18 = arith.constant dense<0.000000e+00> : vector<2xf32>
    %45 = vector.multi_reduction <add>, %44, %cst_18 [1] : vector<2x128xf32> to vector<2xf32>
    %46 = vector.shape_cast %45 : vector<2xf32> to vector<2x1xf32>
    %47 = vector.broadcast %9 : vector<1x1xf32> to vector<2x1xf32>
    %48 = arith.addf %46, %47 : vector<2x1xf32>
    %c0_19 = arith.constant 0 : index
    %c4 = arith.constant 4 : index
    %49 = vector.load %arg4[%c0_19, %c4] : memref<2x16xf32, #tpu.memory_space<vmem>>, vector<2x1xf32>
    tpu.vector_store %arg4[%c0_19, %c4], %48 {strides = array<i32>} : memref<2x16xf32, #tpu.memory_space<vmem>>, vector<2x1xf32>,
    %50 = vector.extract_strided_slice %7 {offsets = [0, 640], sizes = [2, 128], strides = [1, 1]} : vector<2x2048xf32> to vector<2x128xf32>
    %51 = vector.broadcast %8 : vector<1x128xf32> to vector<2x128xf32>
    %52 = arith.mulf %50, %51 : vector<2x128xf32>
    %cst_20 = arith.constant dense<0.000000e+00> : vector<2xf32>
    %53 = vector.multi_reduction <add>, %52, %cst_20 [1] : vector<2x128xf32> to vector<2xf32>
    %54 = vector.shape_cast %53 : vector<2xf32> to vector<2x1xf32>
    %55 = vector.broadcast %9 : vector<1x1xf32> to vector<2x1xf32>
    %56 = arith.addf %54, %55 : vector<2x1xf32>
    %c0_21 = arith.constant 0 : index
    %c5 = arith.constant 5 : index
    %57 = vector.load %arg4[%c0_21, %c5] : memref<2x16xf32, #tpu.memory_space<vmem>>, vector<2x1xf32>
    tpu.vector_store %arg4[%c0_21, %c5], %56 {strides = array<i32>} : memref<2x16xf32, #tpu.memory_space<vmem>>, vector<2x1xf32>,
    %58 = vector.extract_strided_slice %7 {offsets = [0, 768], sizes = [2, 128], strides = [1, 1]} : vector<2x2048xf32> to vector<2x128xf32>
    %59 = vector.broadcast %8 : vector<1x128xf32> to vector<2x128xf32>
    %60 = arith.mulf %58, %59 : vector<2x128xf32>
    %cst_22 = arith.constant dense<0.000000e+00> : vector<2xf32>
    %61 = vector.multi_reduction <add>, %60, %cst_22 [1] : vector<2x128xf32> to vector<2xf32>
    %62 = vector.shape_cast %61 : vector<2xf32> to vector<2x1xf32>
    %63 = vector.broadcast %9 : vector<1x1xf32> to vector<2x1xf32>
    %64 = arith.addf %62, %63 : vector<2x1xf32>
    %c0_23 = arith.constant 0 : index
    %c6 = arith.constant 6 : index
    %65 = vector.load %arg4[%c0_23, %c6] : memref<2x16xf32, #tpu.memory_space<vmem>>, vector<2x1xf32>
    tpu.vector_store %arg4[%c0_23, %c6], %64 {strides = array<i32>} : memref<2x16xf32, #tpu.memory_space<vmem>>, vector<2x1xf32>,
    %66 = vector.extract_strided_slice %7 {offsets = [0, 896], sizes = [2, 128], strides = [1, 1]} : vector<2x2048xf32> to vector<2x128xf32>
    %67 = vector.broadcast %8 : vector<1x128xf32> to vector<2x128xf32>
    %68 = arith.mulf %66, %67 : vector<2x128xf32>
    %cst_24 = arith.constant dense<0.000000e+00> : vector<2xf32>
    %69 = vector.multi_reduction <add>, %68, %cst_24 [1] : vector<2x128xf32> to vector<2xf32>
    %70 = vector.shape_cast %69 : vector<2xf32> to vector<2x1xf32>
    %71 = vector.broadcast %9 : vector<1x1xf32> to vector<2x1xf32>
    %72 = arith.addf %70, %71 : vector<2x1xf32>
    %c0_25 = arith.constant 0 : index
    %c7 = arith.constant 7 : index
    %73 = vector.load %arg4[%c0_25, %c7] : memref<2x16xf32, #tpu.memory_space<vmem>>, vector<2x1xf32>
    tpu.vector_store %arg4[%c0_25, %c7], %72 {strides = array<i32>} : memref<2x16xf32, #tpu.memory_space<vmem>>, vector<2x1xf32>,
    %74 = vector.extract_strided_slice %7 {offsets = [0, 1024], sizes = [2, 128], strides = [1, 1]} : vector<2x2048xf32> to vector<2x128xf32>
    %75 = vector.broadcast %8 : vector<1x128xf32> to vector<2x128xf32>
    %76 = arith.mulf %74, %75 : vector<2x128xf32>
    %cst_26 = arith.constant dense<0.000000e+00> : vector<2xf32>
    %77 = vector.multi_reduction <add>, %76, %cst_26 [1] : vector<2x128xf32> to vector<2xf32>
    %78 = vector.shape_cast %77 : vector<2xf32> to vector<2x1xf32>
    %79 = vector.broadcast %9 : vector<1x1xf32> to vector<2x1xf32>
    %80 = arith.addf %78, %79 : vector<2x1xf32>
    %c0_27 = arith.constant 0 : index
    %c8 = arith.constant 8 : index
    %81 = vector.load %arg4[%c0_27, %c8] : memref<2x16xf32, #tpu.memory_space<vmem>>, vector<2x1xf32>
    tpu.vector_store %arg4[%c0_27, %c8], %80 {strides = array<i32>} : memref<2x16xf32, #tpu.memory_space<vmem>>, vector<2x1xf32>,
    %82 = vector.extract_strided_slice %7 {offsets = [0, 1152], sizes = [2, 128], strides = [1, 1]} : vector<2x2048xf32> to vector<2x128xf32>
    %83 = vector.broadcast %8 : vector<1x128xf32> to vector<2x128xf32>
    %84 = arith.mulf %82, %83 : vector<2x128xf32>
    %cst_28 = arith.constant dense<0.000000e+00> : vector<2xf32>
    %85 = vector.multi_reduction <add>, %84, %cst_28 [1] : vector<2x128xf32> to vector<2xf32>
    %86 = vector.shape_cast %85 : vector<2xf32> to vector<2x1xf32>
    %87 = vector.broadcast %9 : vector<1x1xf32> to vector<2x1xf32>
    %88 = arith.addf %86, %87 : vector<2x1xf32>
    %c0_29 = arith.constant 0 : index
    %c9 = arith.constant 9 : index
    %89 = vector.load %arg4[%c0_29, %c9] : memref<2x16xf32, #tpu.memory_space<vmem>>, vector<2x1xf32>
    tpu.vector_store %arg4[%c0_29, %c9], %88 {strides = array<i32>} : memref<2x16xf32, #tpu.memory_space<vmem>>, vector<2x1xf32>,
    %90 = vector.extract_strided_slice %7 {offsets = [0, 1280], sizes = [2, 128], strides = [1, 1]} : vector<2x2048xf32> to vector<2x128xf32>
    %91 = vector.broadcast %8 : vector<1x128xf32> to vector<2x128xf32>
    %92 = arith.mulf %90, %91 : vector<2x128xf32>
    %cst_30 = arith.constant dense<0.000000e+00> : vector<2xf32>
    %93 = vector.multi_reduction <add>, %92, %cst_30 [1] : vector<2x128xf32> to vector<2xf32>
    %94 = vector.shape_cast %93 : vector<2xf32> to vector<2x1xf32>
    %95 = vector.broadcast %9 : vector<1x1xf32> to vector<2x1xf32>
    %96 = arith.addf %94, %95 : vector<2x1xf32>
    %c0_31 = arith.constant 0 : index
    %c10 = arith.constant 10 : index
    %97 = vector.load %arg4[%c0_31, %c10] : memref<2x16xf32, #tpu.memory_space<vmem>>, vector<2x1xf32>
    tpu.vector_store %arg4[%c0_31, %c10], %96 {strides = array<i32>} : memref<2x16xf32, #tpu.memory_space<vmem>>, vector<2x1xf32>,
    %98 = vector.extract_strided_slice %7 {offsets = [0, 1408], sizes = [2, 128], strides = [1, 1]} : vector<2x2048xf32> to vector<2x128xf32>
    %99 = vector.broadcast %8 : vector<1x128xf32> to vector<2x128xf32>
    %100 = arith.mulf %98, %99 : vector<2x128xf32>
    %cst_32 = arith.constant dense<0.000000e+00> : vector<2xf32>
    %101 = vector.multi_reduction <add>, %100, %cst_32 [1] : vector<2x128xf32> to vector<2xf32>
    %102 = vector.shape_cast %101 : vector<2xf32> to vector<2x1xf32>
    %103 = vector.broadcast %9 : vector<1x1xf32> to vector<2x1xf32>
    %104 = arith.addf %102, %103 : vector<2x1xf32>
    %c0_33 = arith.constant 0 : index
    %c11 = arith.constant 11 : index
    %105 = vector.load %arg4[%c0_33, %c11] : memref<2x16xf32, #tpu.memory_space<vmem>>, vector<2x1xf32>
    tpu.vector_store %arg4[%c0_33, %c11], %104 {strides = array<i32>} : memref<2x16xf32, #tpu.memory_space<vmem>>, vector<2x1xf32>,
    %106 = vector.extract_strided_slice %7 {offsets = [0, 1536], sizes = [2, 128], strides = [1, 1]} : vector<2x2048xf32> to vector<2x128xf32>
    %107 = vector.broadcast %8 : vector<1x128xf32> to vector<2x128xf32>
    %108 = arith.mulf %106, %107 : vector<2x128xf32>
    %cst_34 = arith.constant dense<0.000000e+00> : vector<2xf32>
    %109 = vector.multi_reduction <add>, %108, %cst_34 [1] : vector<2x128xf32> to vector<2xf32>
    %110 = vector.shape_cast %109 : vector<2xf32> to vector<2x1xf32>
    %111 = vector.broadcast %9 : vector<1x1xf32> to vector<2x1xf32>
    %112 = arith.addf %110, %111 : vector<2x1xf32>
    %c0_35 = arith.constant 0 : index
    %c12 = arith.constant 12 : index
    %113 = vector.load %arg4[%c0_35, %c12] : memref<2x16xf32, #tpu.memory_space<vmem>>, vector<2x1xf32>
    tpu.vector_store %arg4[%c0_35, %c12], %112 {strides = array<i32>} : memref<2x16xf32, #tpu.memory_space<vmem>>, vector<2x1xf32>,
    %114 = vector.extract_strided_slice %7 {offsets = [0, 1664], sizes = [2, 128], strides = [1, 1]} : vector<2x2048xf32> to vector<2x128xf32>
    %115 = vector.broadcast %8 : vector<1x128xf32> to vector<2x128xf32>
    %116 = arith.mulf %114, %115 : vector<2x128xf32>
    %cst_36 = arith.constant dense<0.000000e+00> : vector<2xf32>
    %117 = vector.multi_reduction <add>, %116, %cst_36 [1] : vector<2x128xf32> to vector<2xf32>
    %118 = vector.shape_cast %117 : vector<2xf32> to vector<2x1xf32>
    %119 = vector.broadcast %9 : vector<1x1xf32> to vector<2x1xf32>
    %120 = arith.addf %118, %119 : vector<2x1xf32>
    %c0_37 = arith.constant 0 : index
    %c13 = arith.constant 13 : index
    %121 = vector.load %arg4[%c0_37, %c13] : memref<2x16xf32, #tpu.memory_space<vmem>>, vector<2x1xf32>
    tpu.vector_store %arg4[%c0_37, %c13], %120 {strides = array<i32>} : memref<2x16xf32, #tpu.memory_space<vmem>>, vector<2x1xf32>,
    %122 = vector.extract_strided_slice %7 {offsets = [0, 1792], sizes = [2, 128], strides = [1, 1]} : vector<2x2048xf32> to vector<2x128xf32>
    %123 = vector.broadcast %8 : vector<1x128xf32> to vector<2x128xf32>
    %124 = arith.mulf %122, %123 : vector<2x128xf32>
    %cst_38 = arith.constant dense<0.000000e+00> : vector<2xf32>
    %125 = vector.multi_reduction <add>, %124, %cst_38 [1] : vector<2x128xf32> to vector<2xf32>
    %126 = vector.shape_cast %125 : vector<2xf32> to vector<2x1xf32>
    %127 = vector.broadcast %9 : vector<1x1xf32> to vector<2x1xf32>
    %128 = arith.addf %126, %127 : vector<2x1xf32>
    %c0_39 = arith.constant 0 : index
    %c14 = arith.constant 14 : index
    %129 = vector.load %arg4[%c0_39, %c14] : memref<2x16xf32, #tpu.memory_space<vmem>>, vector<2x1xf32>
    tpu.vector_store %arg4[%c0_39, %c14], %128 {strides = array<i32>} : memref<2x16xf32, #tpu.memory_space<vmem>>, vector<2x1xf32>,
    %130 = vector.extract_strided_slice %7 {offsets = [0, 1920], sizes = [2, 128], strides = [1, 1]} : vector<2x2048xf32> to vector<2x128xf32>
    %131 = vector.broadcast %8 : vector<1x128xf32> to vector<2x128xf32>
    %132 = arith.mulf %130, %131 : vector<2x128xf32>
    %cst_40 = arith.constant dense<0.000000e+00> : vector<2xf32>
    %133 = vector.multi_reduction <add>, %132, %cst_40 [1] : vector<2x128xf32> to vector<2xf32>
    %134 = vector.shape_cast %133 : vector<2xf32> to vector<2x1xf32>
    %135 = vector.broadcast %9 : vector<1x1xf32> to vector<2x1xf32>
    %136 = arith.addf %134, %135 : vector<2x1xf32>
    %c0_41 = arith.constant 0 : index
    %c15 = arith.constant 15 : index
    %137 = vector.load %arg4[%c0_41, %c15] : memref<2x16xf32, #tpu.memory_space<vmem>>, vector<2x1xf32>
    tpu.vector_store %arg4[%c0_41, %c15], %136 {strides = array<i32>} : memref<2x16xf32, #tpu.memory_space<vmem>>, vector<2x1xf32>,
    return
  }
}

</mosaic_0001>

<llo_original>
// kernel: _lambda_.1
$region0: #{_lambda_.1}
  #allocation0 [shape = 'u32[]', space=smem, size = 0x4, offset = 0x4, fixed_abs, tag = 'smem constant byte address 0x4 - core index']
  #allocation1 [shape = 'u32[144,128]{1,0:T(1,128)}', space=vmem, size = 0x12000, scoped, tag = 'internal scratch']
  %s0 = inlined_call_operand.vmem [shape: f32[2,16], index: 0, kind: input, shape index: {}]
  %s1 = inlined_call_operand.vmem [shape: bf16[16,2048], index: 1, kind: input, shape index: {}]
  %s2 = inlined_call_operand.vmem [shape: f32[1,2048], index: 2, kind: input, shape index: {}]
  %s3 = inlined_call_operand.vmem [shape: f32[2,128], index: 3, kind: input, shape index: {}]
  %s4 = inlined_call_operand.hbm [shape: f32[2,16], index: 4, kind: output, shape index: {}]
  %s5 = sld [smem:[#allocation0]]
  $region26: #{_lambda_.1} parent=0
    _
  %s7 = ssub.s32 1, %s5
  %s8 = scalar_select 0, %s7, %s5
  $region1: #{_lambda_.1} parent=0
    #allocation2 [shape = 'u8[1024]{0}', space=vmem, size = 0x400, scoped, tag = 'output window, operand 0, single buffered']
    #allocation3 [shape = 's32[1]{0}', space=sflag, size = 0x4, scoped, tag = 'scoped memory for _lambda_.1']
    %9 = vsyncpa [#allocation3], 0
    // Predicated region
    $region2: #{_lambda_.1} parent=1 // pred_check
      _
    $region3: #{_lambda_.1} parent=1 // pred_check_branch
      %11 = sbr.rel (0) target = $region5
    $region4: #{_lambda_.1} parent=1 // pred_region
      _
    $region5: #{_lambda_.1} parent=1 // pred_fallthru
      _
    // Predicated region
    $region6: #{_lambda_.1} parent=1 // pred_check
      _
    $region7: #{_lambda_.1} parent=1 // pred_check_branch
      %13 = sbr.rel (0) target = $region9
    $region8: #{_lambda_.1} parent=1 // pred_region
      _
    $region9: #{_lambda_.1} parent=1 // pred_fallthru
      _
    // Predicated region
    $region10: #{_lambda_.1} parent=1 // pred_check
      _
    $region11: #{_lambda_.1} parent=1 // pred_check_branch
      %15 = sbr.rel (0) target = $region13
    $region12: #{_lambda_.1} parent=1 // pred_region
      _
    $region13: #{_lambda_.1} parent=1 // pred_fallthru
      _
    // Predicated region
    $region14: #{_lambda_.1} parent=1 // pred_check
      _
    $region15: #{_lambda_.1} parent=1 // pred_check_branch
      %17 = sbr.rel (0) target = $region17
    $region16: #{_lambda_.1} parent=1 // pred_region
      _
    $region17: #{_lambda_.1} parent=1 // pred_fallthru
      _
    %v19 = vld [vmem:[%s0] sm:$0x3]
    %v20 = vpack.c.bf16 %v19, %v19
    %v21 = vld [vmem:[%s1] sm:$0xff]
    %v22 = vld [vmem:[%s1 + $0x8] sm:$0xff]
    %v23 = vld [vmem:[%s1 + $0x10] sm:$0xff]
    %v24 = vld [vmem:[%s1 + $0x18] sm:$0xff]
    %v25 = vld [vmem:[%s1 + $0x20] sm:$0xff]
    %v26 = vld [vmem:[%s1 + $0x28] sm:$0xff]
    %v27 = vld [vmem:[%s1 + $0x30] sm:$0xff]
    %v28 = vld [vmem:[%s1 + $0x38] sm:$0xff]
    %v29 = vld [vmem:[%s1 + $0x40] sm:$0xff]
    %v30 = vld [vmem:[%s1 + $0x48] sm:$0xff]
    %v31 = vld [vmem:[%s1 + $0x50] sm:$0xff]
    %v32 = vld [vmem:[%s1 + $0x58] sm:$0xff]
    %v33 = vld [vmem:[%s1 + $0x60] sm:$0xff]
    %v34 = vld [vmem:[%s1 + $0x68] sm:$0xff]
    %v35 = vld [vmem:[%s1 + $0x70] sm:$0xff]
    %v36 = vld [vmem:[%s1 + $0x78] sm:$0xff]
    %v37 = vld [vmem:[%s2] sm:$0xff]
    %v38 = vld [vmem:[%s2 + $0x8] sm:$0xff]
    %v41 = vlaneseq
    %v42 = vshrl.u32 %v41, 7
    %v43 = vsub.s32 0, %v42
    %v44 = vrot.slane %v37, %v43
    %v45 = vlaneseq
    %v46 = vshrl.u32 %v45, 7
    %v47 = vsub.s32 1, %v46
    %v48 = vrot.slane %v37, %v47
    %v49 = vlaneseq
    %v50 = vshrl.u32 %v49, 7
    %v51 = vsub.s32 2, %v50
    %v52 = vrot.slane %v37, %v51
    %v53 = vlaneseq
    %v54 = vshrl.u32 %v53, 7
    %v55 = vsub.s32 3, %v54
    %v56 = vrot.slane %v37, %v55
    %v57 = vlaneseq
    %v58 = vshrl.u32 %v57, 7
    %v59 = vsub.s32 4, %v58
    %v60 = vrot.slane %v37, %v59
    %v61 = vlaneseq
    %v62 = vshrl.u32 %v61, 7
    %v63 = vsub.s32 5, %v62
    %v64 = vrot.slane %v37, %v63
    %v65 = vlaneseq
    %v66 = vshrl.u32 %v65, 7
    %v67 = vsub.s32 6, %v66
    %v68 = vrot.slane %v37, %v67
    %v69 = vlaneseq
    %v70 = vshrl.u32 %v69, 7
    %v71 = vsub.s32 7, %v70
    %v72 = vrot.slane %v37, %v71
    %v73 = vlaneseq
    %v74 = vshrl.u32 %v73, 7
    %v75 = vsub.s32 0, %v74
    %v76 = vrot.slane %v38, %v75
    %v77 = vlaneseq
    %v78 = vshrl.u32 %v77, 7
    %v79 = vsub.s32 1, %v78
    %v80 = vrot.slane %v38, %v79
    %v81 = vlaneseq
    %v82 = vshrl.u32 %v81, 7
    %v83 = vsub.s32 2, %v82
    %v84 = vrot.slane %v38, %v83
    %v85 = vlaneseq
    %v86 = vshrl.u32 %v85, 7
    %v87 = vsub.s32 3, %v86
    %v88 = vrot.slane %v38, %v87
    %v89 = vlaneseq
    %v90 = vshrl.u32 %v89, 7
    %v91 = vsub.s32 4, %v90
    %v92 = vrot.slane %v38, %v91
    %v93 = vlaneseq
    %v94 = vshrl.u32 %v93, 7
    %v95 = vsub.s32 5, %v94
    %v96 = vrot.slane %v38, %v95
    %v97 = vlaneseq
    %v98 = vshrl.u32 %v97, 7
    %v99 = vsub.s32 6, %v98
    %v100 = vrot.slane %v38, %v99
    %v101 = vlaneseq
    %v102 = vshrl.u32 %v101, 7
    %v103 = vsub.s32 7, %v102
    %v104 = vrot.slane %v38, %v103
    %v137 = vunpack.c.l.b16 %v21
    %v138 = vunpack.c.h.b16 %v21
    %v139 = vunpack.c.l.b16 %v22
    %v140 = vunpack.c.h.b16 %v22
    %v141 = vunpack.c.l.b16 %v23
    %v142 = vunpack.c.h.b16 %v23
    %v143 = vunpack.c.l.b16 %v24
    %v144 = vunpack.c.h.b16 %v24
    %v145 = vunpack.c.l.b16 %v25
    %v146 = vunpack.c.h.b16 %v25
    %v147 = vunpack.c.l.b16 %v26
    %v148 = vunpack.c.h.b16 %v26
    %v149 = vunpack.c.l.b16 %v27
    %v150 = vunpack.c.h.b16 %v27
    %v151 = vunpack.c.l.b16 %v28
    %v152 = vunpack.c.h.b16 %v28
    %v153 = vunpack.c.l.b16 %v29
    %v154 = vunpack.c.h.b16 %v29
    %v155 = vunpack.c.l.b16 %v30
    %v156 = vunpack.c.h.b16 %v30
    %v157 = vunpack.c.l.b16 %v31
    %v158 = vunpack.c.h.b16 %v31
    %v159 = vunpack.c.l.b16 %v32
    %v160 = vunpack.c.h.b16 %v32
    %v161 = vunpack.c.l.b16 %v33
    %v162 = vunpack.c.h.b16 %v33
    %v163 = vunpack.c.l.b16 %v34
    %v164 = vunpack.c.h.b16 %v34
    %v165 = vunpack.c.l.b16 %v35
    %v166 = vunpack.c.h.b16 %v35
    %v167 = vunpack.c.l.b16 %v36
    %v168 = vunpack.c.h.b16 %v36
    %v169 = vpack.c.b16 %v153, %v137
    %v170 = vpack.c.b16 %v154, %v138
    %v171 = vpack.c.b16 %v155, %v139
    %v172 = vpack.c.b16 %v156, %v140
    %v173 = vpack.c.b16 %v157, %v141
    %v174 = vpack.c.b16 %v158, %v142
    %v175 = vpack.c.b16 %v159, %v143
    %v176 = vpack.c.b16 %v160, %v144
    %v177 = vpack.c.b16 %v161, %v145
    %v178 = vpack.c.b16 %v162, %v146
    %v179 = vpack.c.b16 %v163, %v147
    %v180 = vpack.c.b16 %v164, %v148
    %v181 = vpack.c.b16 %v165, %v149
    %v182 = vpack.c.b16 %v166, %v150
    %v183 = vpack.c.b16 %v167, %v151
    %v184 = vpack.c.b16 %v168, %v152
    %vm201 = vcmask 130048
    %v203 = vsel %vm201, %v20, 0
    %205 = vmatprep.subr.bf16.mxu0 %v170
    %206 = vmatpush1.bf16.msra.mxu0 %v169
    %207 = vmatprep.subr.bf16.mxu0 0
    %208 = vmatpush1.bf16.msra.mxu0 0
    %209 = vmatprep.subr.bf16.mxu0 0
    %210 = vmatpush1.bf16.msra.mxu0 0
    %211 = vmatprep.subr.bf16.mxu0 0
    %212 = vmatpush1.bf16.msra.mxu0 0
    %213 = vmatprep.subr.bf16.mxu0 0
    %214 = vmatpush1.bf16.msra.mxu0 0
    %215 = vmatprep.subr.bf16.mxu0 0
    %216 = vmatpush1.bf16.msra.mxu0 0
    %217 = vmatprep.subr.bf16.mxu0 0
    %218 = vmatpush1.bf16.msra.mxu0 0
    %219 = vmatprep.subr.bf16.mxu0 0
    %220 = vmatpush1.bf16.msra.mxu0 0
    %221 = vmatprep.subr.bf16.mxu0 0
    %222 = vmatpush1.bf16.msra.mxu0 0
    %223 = vmatprep.subr.bf16.mxu0 0
    %224 = vmatpush1.bf16.msra.mxu0 0
    %225 = vmatprep.subr.bf16.mxu0 0
    %226 = vmatpush1.bf16.msra.mxu0 0
    %227 = vmatprep.subr.bf16.mxu0 0
    %228 = vmatpush1.bf16.msra.mxu0 0
    %229 = vmatprep.subr.bf16.mxu0 0
    %230 = vmatpush1.bf16.msra.mxu0 0
    %231 = vmatprep.subr.bf16.mxu0 0
    %232 = vmatpush1.bf16.msra.mxu0 0
    %233 = vmatprep.subr.bf16.mxu0 0
    %234 = vmatpush1.bf16.msra.mxu0 0
    %235 = vmatprep.subr.bf16.mxu0 0
    %236 = vmatpush1.bf16.msra.mxu0 0
    %237 = vmatprep.mubr.bf16.mxu0 0
    %238 = vmatmul.mubr.bf16.gmra.mrb[0].mxu0 %v203
    %v239 = vpop.f32.mrb[0].mxu0
    %v240 = vadd.f32 %v44, %v239
    %v241 = vpop.f32.mrb[0].mxu0
    %v242 = vadd.f32 %v48, %v241
    %v243 = vpop.f32.mrb[0].mxu0
    %v244 = vpop.f32.mrb[0].mxu0
    %245 = vdwg.mxu0
    %246 = vmatprep.subr.bf16.mxu0 %v172
    %247 = vmatpush1.bf16.msra.mxu0 %v171
    %248 = vmatprep.subr.bf16.mxu0 0
    %249 = vmatpush1.bf16.msra.mxu0 0
    %250 = vmatprep.subr.bf16.mxu0 0
    %251 = vmatpush1.bf16.msra.mxu0 0
    %252 = vmatprep.subr.bf16.mxu0 0
    %253 = vmatpush1.bf16.msra.mxu0 0
    %254 = vmatprep.subr.bf16.mxu0 0
    %255 = vmatpush1.bf16.msra.mxu0 0
    %256 = vmatprep.subr.bf16.mxu0 0
    %257 = vmatpush1.bf16.msra.mxu0 0
    %258 = vmatprep.subr.bf16.mxu0 0
    %259 = vmatpush1.bf16.msra.mxu0 0
    %260 = vmatprep.subr.bf16.mxu0 0
    %261 = vmatpush1.bf16.msra.mxu0 0
    %262 = vmatprep.subr.bf16.mxu0 0
    %263 = vmatpush1.bf16.msra.mxu0 0
    %264 = vmatprep.subr.bf16.mxu0 0
    %265 = vmatpush1.bf16.msra.mxu0 0
    %266 = vmatprep.subr.bf16.mxu0 0
    %267 = vmatpush1.bf16.msra.mxu0 0
    %268 = vmatprep.subr.bf16.mxu0 0
    %269 = vmatpush1.bf16.msra.mxu0 0
    %270 = vmatprep.subr.bf16.mxu0 0
    %271 = vmatpush1.bf16.msra.mxu0 0
    %272 = vmatprep.subr.bf16.mxu0 0
    %273 = vmatpush1.bf16.msra.mxu0 0
    %274 = vmatprep.subr.bf16.mxu0 0
    %275 = vmatpush1.bf16.msra.mxu0 0
    %276 = vmatprep.subr.bf16.mxu0 0
    %277 = vmatpush1.bf16.msra.mxu0 0
    %278 = vmatprep.mubr.bf16.mxu0 0
    %279 = vmatmul.mubr.bf16.gmra.mrb[0].mxu0 %v203
    %v280 = vpop.f32.mrb[0].mxu0
    %v281 = vadd.f32 %v52, %v280
    %v282 = vpop.f32.mrb[0].mxu0
    %v283 = vadd.f32 %v56, %v282
    %v284 = vpop.f32.mrb[0].mxu0
    %v285 = vpop.f32.mrb[0].mxu0
    %286 = vdwg.mxu0
    %287 = vmatprep.subr.bf16.mxu0 %v174
    %288 = vmatpush1.bf16.msra.mxu0 %v173
    %289 = vmatprep.subr.bf16.mxu0 0
    %290 = vmatpush1.bf16.msra.mxu0 0
    %291 = vmatprep.subr.bf16.mxu0 0
    %292 = vmatpush1.bf16.msra.mxu0 0
    %293 = vmatprep.subr.bf16.mxu0 0
    %294 = vmatpush1.bf16.msra.mxu0 0
    %295 = vmatprep.subr.bf16.mxu0 0
    %296 = vmatpush1.bf16.msra.mxu0 0
    %297 = vmatprep.subr.bf16.mxu0 0
    %298 = vmatpush1.bf16.msra.mxu0 0
    %299 = vmatprep.subr.bf16.mxu0 0
    %300 = vmatpush1.bf16.msra.mxu0 0
    %301 = vmatprep.subr.bf16.mxu0 0
    %302 = vmatpush1.bf16.msra.mxu0 0
    %303 = vmatprep.subr.bf16.mxu0 0
    %304 = vmatpush1.bf16.msra.mxu0 0
    %305 = vmatprep.subr.bf16.mxu0 0
    %306 = vmatpush1.bf16.msra.mxu0 0
    %307 = vmatprep.subr.bf16.mxu0 0
    %308 = vmatpush1.bf16.msra.mxu0 0
    %309 = vmatprep.subr.bf16.mxu0 0
    %310 = vmatpush1.bf16.msra.mxu0 0
    %311 = vmatprep.subr.bf16.mxu0 0
    %312 = vmatpush1.bf16.msra.mxu0 0
    %313 = vmatprep.subr.bf16.mxu0 0
    %314 = vmatpush1.bf16.msra.mxu0 0
    %315 = vmatprep.subr.bf16.mxu0 0
    %316 = vmatpush1.bf16.msra.mxu0 0
    %317 = vmatprep.subr.bf16.mxu0 0
    %318 = vmatpush1.bf16.msra.mxu0 0
    %319 = vmatprep.mubr.bf16.mxu0 0
    %320 = vmatmul.mubr.bf16.gmra.mrb[0].mxu0 %v203
    %v321 = vpop.f32.mrb[0].mxu0
    %v322 = vadd.f32 %v60, %v321
    %v323 = vpop.f32.mrb[0].mxu0
    %v324 = vadd.f32 %v64, %v323
    %v325 = vpop.f32.mrb[0].mxu0
    %v326 = vpop.f32.mrb[0].mxu0
    %327 = vdwg.mxu0
    %328 = vmatprep.subr.bf16.mxu0 %v176
    %329 = vmatpush1.bf16.msra.mxu0 %v175
    %330 = vmatprep.subr.bf16.mxu0 0
    %331 = vmatpush1.bf16.msra.mxu0 0
    %332 = vmatprep.subr.bf16.mxu0 0
    %333 = vmatpush1.bf16.msra.mxu0 0
    %334 = vmatprep.subr.bf16.mxu0 0
    %335 = vmatpush1.bf16.msra.mxu0 0
    %336 = vmatprep.subr.bf16.mxu0 0
    %337 = vmatpush1.bf16.msra.mxu0 0
    %338 = vmatprep.subr.bf16.mxu0 0
    %339 = vmatpush1.bf16.msra.mxu0 0
    %340 = vmatprep.subr.bf16.mxu0 0
    %341 = vmatpush1.bf16.msra.mxu0 0
    %342 = vmatprep.subr.bf16.mxu0 0
    %343 = vmatpush1.bf16.msra.mxu0 0
    %344 = vmatprep.subr.bf16.mxu0 0
    %345 = vmatpush1.bf16.msra.mxu0 0
    %346 = vmatprep.subr.bf16.mxu0 0
    %347 = vmatpush1.bf16.msra.mxu0 0
    %348 = vmatprep.subr.bf16.mxu0 0
    %349 = vmatpush1.bf16.msra.mxu0 0
    %350 = vmatprep.subr.bf16.mxu0 0
    %351 = vmatpush1.bf16.msra.mxu0 0
    %352 = vmatprep.subr.bf16.mxu0 0
    %353 = vmatpush1.bf16.msra.mxu0 0
    %354 = vmatprep.subr.bf16.mxu0 0
    %355 = vmatpush1.bf16.msra.mxu0 0
    %356 = vmatprep.subr.bf16.mxu0 0
    %357 = vmatpush1.bf16.msra.mxu0 0
    %358 = vmatprep.subr.bf16.mxu0 0
    %359 = vmatpush1.bf16.msra.mxu0 0
    %360 = vmatprep.mubr.bf16.mxu0 0
    %361 = vmatmul.mubr.bf16.gmra.mrb[0].mxu0 %v203
    %v362 = vpop.f32.mrb[0].mxu0
    %v363 = vadd.f32 %v68, %v362
    %v364 = vpop.f32.mrb[0].mxu0
    %v365 = vadd.f32 %v72, %v364
    %v366 = vpop.f32.mrb[0].mxu0
    %v367 = vpop.f32.mrb[0].mxu0
    %368 = vdwg.mxu0
    %369 = vmatprep.subr.bf16.mxu0 %v178
    %370 = vmatpush1.bf16.msra.mxu0 %v177
    %371 = vmatprep.subr.bf16.mxu0 0
    %372 = vmatpush1.bf16.msra.mxu0 0
    %373 = vmatprep.subr.bf16.mxu0 0
    %374 = vmatpush1.bf16.msra.mxu0 0
    %375 = vmatprep.subr.bf16.mxu0 0
    %376 = vmatpush1.bf16.msra.mxu0 0
    %377 = vmatprep.subr.bf16.mxu0 0
    %378 = vmatpush1.bf16.msra.mxu0 0
    %379 = vmatprep.subr.bf16.mxu0 0
    %380 = vmatpush1.bf16.msra.mxu0 0
    %381 = vmatprep.subr.bf16.mxu0 0
    %382 = vmatpush1.bf16.msra.mxu0 0
    %383 = vmatprep.subr.bf16.mxu0 0
    %384 = vmatpush1.bf16.msra.mxu0 0
    %385 = vmatprep.subr.bf16.mxu0 0
    %386 = vmatpush1.bf16.msra.mxu0 0
    %387 = vmatprep.subr.bf16.mxu0 0
    %388 = vmatpush1.bf16.msra.mxu0 0
    %389 = vmatprep.subr.bf16.mxu0 0
    %390 = vmatpush1.bf16.msra.mxu0 0
    %391 = vmatprep.subr.bf16.mxu0 0
    %392 = vmatpush1.bf16.msra.mxu0 0
    %393 = vmatprep.subr.bf16.mxu0 0
    %394 = vmatpush1.bf16.msra.mxu0 0
    %395 = vmatprep.subr.bf16.mxu0 0
    %396 = vmatpush1.bf16.msra.mxu0 0
    %397 = vmatprep.subr.bf16.mxu0 0
    %398 = vmatpush1.bf16.msra.mxu0 0
    %399 = vmatprep.subr.bf16.mxu0 0
    %400 = vmatpush1.bf16.msra.mxu0 0
    %401 = vmatprep.mubr.bf16.mxu0 0
    %402 = vmatmul.mubr.bf16.gmra.mrb[0].mxu0 %v203
    %v403 = vpop.f32.mrb[0].mxu0
    %v404 = vadd.f32 %v76, %v403
    %v405 = vpop.f32.mrb[0].mxu0
    %v406 = vadd.f32 %v80, %v405
    %v407 = vpop.f32.mrb[0].mxu0
    %v408 = vpop.f32.mrb[0].mxu0
    %409 = vdwg.mxu0
    %410 = vmatprep.subr.bf16.mxu0 %v180
    %411 = vmatpush1.bf16.msra.mxu0 %v179
    %412 = vmatprep.subr.bf16.mxu0 0
    %413 = vmatpush1.bf16.msra.mxu0 0
    %414 = vmatprep.subr.bf16.mxu0 0
    %415 = vmatpush1.bf16.msra.mxu0 0
    %416 = vmatprep.subr.bf16.mxu0 0
    %417 = vmatpush1.bf16.msra.mxu0 0
    %418 = vmatprep.subr.bf16.mxu0 0
    %419 = vmatpush1.bf16.msra.mxu0 0
    %420 = vmatprep.subr.bf16.mxu0 0
    %421 = vmatpush1.bf16.msra.mxu0 0
    %422 = vmatprep.subr.bf16.mxu0 0
    %423 = vmatpush1.bf16.msra.mxu0 0
    %424 = vmatprep.subr.bf16.mxu0 0
    %425 = vmatpush1.bf16.msra.mxu0 0
    %426 = vmatprep.subr.bf16.mxu0 0
    %427 = vmatpush1.bf16.msra.mxu0 0
    %428 = vmatprep.subr.bf16.mxu0 0
    %429 = vmatpush1.bf16.msra.mxu0 0
    %430 = vmatprep.subr.bf16.mxu0 0
    %431 = vmatpush1.bf16.msra.mxu0 0
    %432 = vmatprep.subr.bf16.mxu0 0
    %433 = vmatpush1.bf16.msra.mxu0 0
    %434 = vmatprep.subr.bf16.mxu0 0
    %435 = vmatpush1.bf16.msra.mxu0 0
    %436 = vmatprep.subr.bf16.mxu0 0
    %437 = vmatpush1.bf16.msra.mxu0 0
    %438 = vmatprep.subr.bf16.mxu0 0
    %439 = vmatpush1.bf16.msra.mxu0 0
    %440 = vmatprep.subr.bf16.mxu0 0
    %441 = vmatpush1.bf16.msra.mxu0 0
    %442 = vmatprep.mubr.bf16.mxu0 0
    %443 = vmatmul.mubr.bf16.gmra.mrb[0].mxu0 %v203
    %v444 = vpop.f32.mrb[0].mxu0
    %v445 = vadd.f32 %v84, %v444
    %v446 = vpop.f32.mrb[0].mxu0
    %v447 = vadd.f32 %v88, %v446
    %v448 = vpop.f32.mrb[0].mxu0
    %v449 = vpop.f32.mrb[0].mxu0
    %450 = vdwg.mxu0
    %451 = vmatprep.subr.bf16.mxu0 %v182
    %452 = vmatpush1.bf16.msra.mxu0 %v181
    %453 = vmatprep.subr.bf16.mxu0 0
    %454 = vmatpush1.bf16.msra.mxu0 0
    %455 = vmatprep.subr.bf16.mxu0 0
    %456 = vmatpush1.bf16.msra.mxu0 0
    %457 = vmatprep.subr.bf16.mxu0 0
    %458 = vmatpush1.bf16.msra.mxu0 0
    %459 = vmatprep.subr.bf16.mxu0 0
    %460 = vmatpush1.bf16.msra.mxu0 0
    %461 = vmatprep.subr.bf16.mxu0 0
    %462 = vmatpush1.bf16.msra.mxu0 0
    %463 = vmatprep.subr.bf16.mxu0 0
    %464 = vmatpush1.bf16.msra.mxu0 0
    %465 = vmatprep.subr.bf16.mxu0 0
    %466 = vmatpush1.bf16.msra.mxu0 0
    %467 = vmatprep.subr.bf16.mxu0 0
    %468 = vmatpush1.bf16.msra.mxu0 0
    %469 = vmatprep.subr.bf16.mxu0 0
    %470 = vmatpush1.bf16.msra.mxu0 0
    %471 = vmatprep.subr.bf16.mxu0 0
    %472 = vmatpush1.bf16.msra.mxu0 0
    %473 = vmatprep.subr.bf16.mxu0 0
    %474 = vmatpush1.bf16.msra.mxu0 0
    %475 = vmatprep.subr.bf16.mxu0 0
    %476 = vmatpush1.bf16.msra.mxu0 0
    %477 = vmatprep.subr.bf16.mxu0 0
    %478 = vmatpush1.bf16.msra.mxu0 0
    %479 = vmatprep.subr.bf16.mxu0 0
    %480 = vmatpush1.bf16.msra.mxu0 0
    %481 = vmatprep.subr.bf16.mxu0 0
    %482 = vmatpush1.bf16.msra.mxu0 0
    %483 = vmatprep.mubr.bf16.mxu0 0
    %484 = vmatmul.mubr.bf16.gmra.mrb[0].mxu0 %v203
    %v485 = vpop.f32.mrb[0].mxu0
    %v486 = vadd.f32 %v92, %v485
    %v487 = vpop.f32.mrb[0].mxu0
    %v488 = vadd.f32 %v96, %v487
    %v489 = vpop.f32.mrb[0].mxu0
    %v490 = vpop.f32.mrb[0].mxu0
    %491 = vdwg.mxu0
    %492 = vmatprep.subr.bf16.mxu0 %v184
    %493 = vmatpush1.bf16.msra.mxu0 %v183
    %494 = vmatprep.subr.bf16.mxu0 0
    %495 = vmatpush1.bf16.msra.mxu0 0
    %496 = vmatprep.subr.bf16.mxu0 0
    %497 = vmatpush1.bf16.msra.mxu0 0
    %498 = vmatprep.subr.bf16.mxu0 0
    %499 = vmatpush1.bf16.msra.mxu0 0
    %500 = vmatprep.subr.bf16.mxu0 0
    %501 = vmatpush1.bf16.msra.mxu0 0
    %502 = vmatprep.subr.bf16.mxu0 0
    %503 = vmatpush1.bf16.msra.mxu0 0
    %504 = vmatprep.subr.bf16.mxu0 0
    %505 = vmatpush1.bf16.msra.mxu0 0
    %506 = vmatprep.subr.bf16.mxu0 0
    %507 = vmatpush1.bf16.msra.mxu0 0
    %508 = vmatprep.subr.bf16.mxu0 0
    %509 = vmatpush1.bf16.msra.mxu0 0
    %510 = vmatprep.subr.bf16.mxu0 0
    %511 = vmatpush1.bf16.msra.mxu0 0
    %512 = vmatprep.subr.bf16.mxu0 0
    %513 = vmatpush1.bf16.msra.mxu0 0
    %514 = vmatprep.subr.bf16.mxu0 0
    %515 = vmatpush1.bf16.msra.mxu0 0
    %516 = vmatprep.subr.bf16.mxu0 0
    %517 = vmatpush1.bf16.msra.mxu0 0
    %518 = vmatprep.subr.bf16.mxu0 0
    %519 = vmatpush1.bf16.msra.mxu0 0
    %520 = vmatprep.subr.bf16.mxu0 0
    %521 = vmatpush1.bf16.msra.mxu0 0
    %522 = vmatprep.subr.bf16.mxu0 0
    %523 = vmatpush1.bf16.msra.mxu0 0
    %524 = vmatprep.mubr.bf16.mxu0 0
    %525 = vmatmul.mubr.bf16.gmra.mrb[0].mxu0 %v203
    %v526 = vpop.f32.mrb[0].mxu0
    %v527 = vadd.f32 %v100, %v526
    %v528 = vpop.f32.mrb[0].mxu0
    %v529 = vadd.f32 %v104, %v528
    %v530 = vpop.f32.mrb[0].mxu0
    %v531 = vpop.f32.mrb[0].mxu0
    %532 = vdwg.mxu0
    %v533 = vand.u32 2147483647, %v240
    %vm534 = vcmp.le.f32.partialorder %v533, 0.7853982
    %vm535 = vcmp.lt.s32.totalorder %v240, 0
    %v536 = vand.u32 %v240, 2139095040
    %v537 = vshrl.u32 %v536, 23
    %v538 = vsub.s32 %v537, 127
    %v539 = vand.u32 2147483647, %v240
    %v540 = vand.u32 %v539, 8388607
    %v541 = vor.u32 %v540, 8388608
    %v542 = vsub.s32 0, %v541
    %v543 = vadd.s32 %v538, 1
    %vm544 = vcmp.gt.s32.totalorder %v543, 0
    %v545 = vsel %vm544, %v543, 0
    %v546 = vshrl.u32 %v545, 5
    %v547 = vand.u32 %v545, 31
    %v548 = vsub.s32 32, %v547
    %v549 = vshrl.u32 683565275, %v548
    %v550 = vshll.u32 683565275, %v547
    %v551 = vshrl.u32 2475754826, %v548
    %v552 = vor.u32 %v550, %v551
    %v553 = vshll.u32 2475754826, %v547
    %v554 = vshrl.u32 2131351028, %v548
    %v555 = vor.u32 %v553, %v554
    %v556 = vshll.u32 2131351028, %v547
    %v557 = vshrl.u32 2102212464, %v548
    %v558 = vor.u32 %v556, %v557
    %v559 = vshll.u32 2102212464, %v547
    %v560 = vshrl.u32 920167782, %v548
    %v561 = vor.u32 %v559, %v560
    %v562 = vshll.u32 920167782, %v547
    %v563 = vshrl.u32 1326507024, %v548
    %v564 = vor.u32 %v562, %v563
    %vm565 = vcmp.lt.s32.totalorder %v546, 1
    %vm566 = vcmp.lt.s32.totalorder %v546, 2
    %vm567 = vcmp.lt.s32.totalorder %v546, 3
    %vm568 = vcmp.lt.s32.totalorder %v546, 4
    %v569 = vsel %vm565, %v549, %v552
    %v570 = vsel %vm568, %v558, 2102212464
    %v571 = vsel %vm567, %v555, %v570
    %v572 = vsel %vm566, %v569, %v571
    %v573 = vsel %vm565, %v552, %v555
    %v574 = vsel %vm568, %v561, 920167782
    %v575 = vsel %vm567, %v558, %v574
    %v576 = vsel %vm566, %v573, %v575
    %v577 = vsel %vm565, %v555, %v558
    %v578 = vsel %vm568, %v564, 1326507024
    %v579 = vsel %vm567, %v561, %v578
    %v580 = vsel %vm566, %v577, %v579
    %v581 = vshll.u32 %v541, 8
    %v582 = vmul.u32.u64.compose %v581, %v580
    %v583 = vextract.low.u32 %v582
    %v584 = vextract.high.u32 %v582
    %v585 = vmul.u32.u64.compose %v581, %v576
    %v586 = vextract.low.u32 %v585
    %v587 = vextract.high.u32 %v585
    %v588 = vmul.u32 %v581, %v572
    %v589 = vadd.s32 %v584, %v586
    %vm590 = vc.u32 %v584, %v586
    %v591 = vadd.s32 %v587, 1
    %v592 = vsel %vm590, %v591, %v587
    %v593 = vadd.s32 %v588, %v592
    %v594 = vadd.s32 %v593, 536870912
    %v595 = vshrl.u32 %v594, 30
    %v596 = vshll.u32 %v595, 30
    %v597 = vsub.s32 %v593, %v596
    %vm598 = vcmp.lt.s32.totalorder %v597, 0
    %v599 = vsub.s32 0, %v597
    %v600 = vsel %vm598, %v599, %v597
    %v601 = vclz %v600
    %v602 = vsub.s32 %v601, 2
    %vm603 = vcmp.gt.s32.totalorder 0, %v602
    %v604 = vsel %vm603, 0, %v602
    %v605 = vsub.s32 32, %v604
    %v606 = vshll.u32 %v597, %v604
    %v607 = vshrl.u32 %v589, %v605
    %v608 = vor.u32 %v606, %v607
    %v609 = vsub.s32 4294967266, %v604
    %v610 = vadd.s32 %v609, 127
    %v611 = vshll.u32 %v610, 23
    %v612 = vor.u32 4788187, %v611
    %v613 = vand.u32 2147483647, %v612
    %v615 = vcvt.s32.f32 %v608
    %v616 = vmul.f32 %v615, %v613
    %v617 = vxor.u32 %v616, 2147483648
    %v618 = vsel %vm535, %v617, %v616
    %v619 = vsub.s32 4, %v595
    %v620 = vsel %vm535, %v619, %v595
    %v621 = vsel %vm534, %v240, %v618
    %v622 = vsel %vm534, 0, %v620
    %v623 = vcosq.f32.pop %v621
    %v624 = vsinq.f32.pop %v621
    %vm625 = vweird.f32 %v240
    %v626 = vadd.s32 %v622, 3
    %v627 = vand.u32 %v626, 3
    %vm628 = vcmp.lt.s32.totalorder %v627, 2
    %vm629 = vcmp.eq.s32.totalorder %v627, 0
    %v630 = vxor.u32 %v624, 2147483648
    %v631 = vsel %vm629, %v623, %v630
    %vm632 = vcmp.eq.s32.totalorder %v627, 2
    %v633 = vxor.u32 %v623, 2147483648
    %v634 = vsel %vm632, %v633, %v624
    %v635 = vsel %vm628, %v631, %v634
    %v636 = vsel %vm625, nan, %v635
    %v637 = vand.u32 2147483647, %v242
    %vm638 = vcmp.le.f32.partialorder %v637, 0.7853982
    %vm639 = vcmp.lt.s32.totalorder %v242, 0
    %v640 = vand.u32 %v242, 2139095040
    %v641 = vshrl.u32 %v640, 23
    %v642 = vsub.s32 %v641, 127
    %v643 = vand.u32 2147483647, %v242
    %v644 = vand.u32 %v643, 8388607
    %v645 = vor.u32 %v644, 8388608
    %v646 = vsub.s32 0, %v645
    %v647 = vadd.s32 %v642, 1
    %vm648 = vcmp.gt.s32.totalorder %v647, 0
    %v649 = vsel %vm648, %v647, 0
    %v650 = vshrl.u32 %v649, 5
    %v651 = vand.u32 %v649, 31
    %v652 = vsub.s32 32, %v651
    %v653 = vshrl.u32 683565275, %v652
    %v654 = vshll.u32 683565275, %v651
    %v655 = vshrl.u32 2475754826, %v652
    %v656 = vor.u32 %v654, %v655
    %v657 = vshll.u32 2475754826, %v651
    %v658 = vshrl.u32 2131351028, %v652
    %v659 = vor.u32 %v657, %v658
    %v660 = vshll.u32 2131351028, %v651
    %v661 = vshrl.u32 2102212464, %v652
    %v662 = vor.u32 %v660, %v661
    %v663 = vshll.u32 2102212464, %v651
    %v664 = vshrl.u32 920167782, %v652
    %v665 = vor.u32 %v663, %v664
    %v666 = vshll.u32 920167782, %v651
    %v667 = vshrl.u32 1326507024, %v652
    %v668 = vor.u32 %v666, %v667
    %vm669 = vcmp.lt.s32.totalorder %v650, 1
    %vm670 = vcmp.lt.s32.totalorder %v650, 2
    %vm671 = vcmp.lt.s32.totalorder %v650, 3
    %vm672 = vcmp.lt.s32.totalorder %v650, 4
    %v673 = vsel %vm669, %v653, %v656
    %v674 = vsel %vm672, %v662, 2102212464
    %v675 = vsel %vm671, %v659, %v674
    %v676 = vsel %vm670, %v673, %v675
    %v677 = vsel %vm669, %v656, %v659
    %v678 = vsel %vm672, %v665, 920167782
    %v679 = vsel %vm671, %v662, %v678
    %v680 = vsel %vm670, %v677, %v679
    %v681 = vsel %vm669, %v659, %v662
    %v682 = vsel %vm672, %v668, 1326507024
    %v683 = vsel %vm671, %v665, %v682
    %v684 = vsel %vm670, %v681, %v683
    %v685 = vshll.u32 %v645, 8
    %v686 = vmul.u32.u64.compose %v685, %v684
    %v687 = vextract.low.u32 %v686
    %v688 = vextract.high.u32 %v686
    %v689 = vmul.u32.u64.compose %v685, %v680
    %v690 = vextract.low.u32 %v689
    %v691 = vextract.high.u32 %v689
    %v692 = vmul.u32 %v685, %v676
    %v693 = vadd.s32 %v688, %v690
    %vm694 = vc.u32 %v688, %v690
    %v695 = vadd.s32 %v691, 1
    %v696 = vsel %vm694, %v695, %v691
    %v697 = vadd.s32 %v692, %v696
    %v698 = vadd.s32 %v697, 536870912
    %v699 = vshrl.u32 %v698, 30
    %v700 = vshll.u32 %v699, 30
    %v701 = vsub.s32 %v697, %v700
    %vm702 = vcmp.lt.s32.totalorder %v701, 0
    %v703 = vsub.s32 0, %v701
    %v704 = vsel %vm702, %v703, %v701
    %v705 = vclz %v704
    %v706 = vsub.s32 %v705, 2
    %vm707 = vcmp.gt.s32.totalorder 0, %v706
    %v708 = vsel %vm707, 0, %v706
    %v709 = vsub.s32 32, %v708
    %v710 = vshll.u32 %v701, %v708
    %v711 = vshrl.u32 %v693, %v709
    %v712 = vor.u32 %v710, %v711
    %v713 = vsub.s32 4294967266, %v708
    %v714 = vadd.s32 %v713, 127
    %v715 = vshll.u32 %v714, 23
    %v716 = vor.u32 4788187, %v715
    %v717 = vand.u32 2147483647, %v716
    %v719 = vcvt.s32.f32 %v712
    %v720 = vmul.f32 %v719, %v717
    %v721 = vxor.u32 %v720, 2147483648
    %v722 = vsel %vm639, %v721, %v720
    %v723 = vsub.s32 4, %v699
    %v724 = vsel %vm639, %v723, %v699
    %v725 = vsel %vm638, %v242, %v722
    %v726 = vsel %vm638, 0, %v724
    %v727 = vcosq.f32.pop %v725
    %v728 = vsinq.f32.pop %v725
    %vm729 = vweird.f32 %v242
    %v730 = vadd.s32 %v726, 3
    %v731 = vand.u32 %v730, 3
    %vm732 = vcmp.lt.s32.totalorder %v731, 2
    %vm733 = vcmp.eq.s32.totalorder %v731, 0
    %v734 = vxor.u32 %v728, 2147483648
    %v735 = vsel %vm733, %v727, %v734
    %vm736 = vcmp.eq.s32.totalorder %v731, 2
    %v737 = vxor.u32 %v727, 2147483648
    %v738 = vsel %vm736, %v737, %v728
    %v739 = vsel %vm732, %v735, %v738
    %v740 = vsel %vm729, nan, %v739
    %v741 = vand.u32 2147483647, %v281
    %vm742 = vcmp.le.f32.partialorder %v741, 0.7853982
    %vm743 = vcmp.lt.s32.totalorder %v281, 0
    %v744 = vand.u32 %v281, 2139095040
    %v745 = vshrl.u32 %v744, 23
    %v746 = vsub.s32 %v745, 127
    %v747 = vand.u32 2147483647, %v281
    %v748 = vand.u32 %v747, 8388607
    %v749 = vor.u32 %v748, 8388608
    %v750 = vsub.s32 0, %v749
    %v751 = vadd.s32 %v746, 1
    %vm752 = vcmp.gt.s32.totalorder %v751, 0
    %v753 = vsel %vm752, %v751, 0
    %v754 = vshrl.u32 %v753, 5
    %v755 = vand.u32 %v753, 31
    %v756 = vsub.s32 32, %v755
    %v757 = vshrl.u32 683565275, %v756
    %v758 = vshll.u32 683565275, %v755
    %v759 = vshrl.u32 2475754826, %v756
    %v760 = vor.u32 %v758, %v759
    %v761 = vshll.u32 2475754826, %v755
    %v762 = vshrl.u32 2131351028, %v756
    %v763 = vor.u32 %v761, %v762
    %v764 = vshll.u32 2131351028, %v755
    %v765 = vshrl.u32 2102212464, %v756
    %v766 = vor.u32 %v764, %v765
    %v767 = vshll.u32 2102212464, %v755
    %v768 = vshrl.u32 920167782, %v756
    %v769 = vor.u32 %v767, %v768
    %v770 = vshll.u32 920167782, %v755
    %v771 = vshrl.u32 1326507024, %v756
    %v772 = vor.u32 %v770, %v771
    %vm773 = vcmp.lt.s32.totalorder %v754, 1
    %vm774 = vcmp.lt.s32.totalorder %v754, 2
    %vm775 = vcmp.lt.s32.totalorder %v754, 3
    %vm776 = vcmp.lt.s32.totalorder %v754, 4
    %v777 = vsel %vm773, %v757, %v760
    %v778 = vsel %vm776, %v766, 2102212464
    %v779 = vsel %vm775, %v763, %v778
    %v780 = vsel %vm774, %v777, %v779
    %v781 = vsel %vm773, %v760, %v763
    %v782 = vsel %vm776, %v769, 920167782
    %v783 = vsel %vm775, %v766, %v782
    %v784 = vsel %vm774, %v781, %v783
    %v785 = vsel %vm773, %v763, %v766
    %v786 = vsel %vm776, %v772, 1326507024
    %v787 = vsel %vm775, %v769, %v786
    %v788 = vsel %vm774, %v785, %v787
    %v789 = vshll.u32 %v749, 8
    %v790 = vmul.u32.u64.compose %v789, %v788
    %v791 = vextract.low.u32 %v790
    %v792 = vextract.high.u32 %v790
    %v793 = vmul.u32.u64.compose %v789, %v784
    %v794 = vextract.low.u32 %v793
    %v795 = vextract.high.u32 %v793
    %v796 = vmul.u32 %v789, %v780
    %v797 = vadd.s32 %v792, %v794
    %vm798 = vc.u32 %v792, %v794
    %v799 = vadd.s32 %v795, 1
    %v800 = vsel %vm798, %v799, %v795
    %v801 = vadd.s32 %v796, %v800
    %v802 = vadd.s32 %v801, 536870912
    %v803 = vshrl.u32 %v802, 30
    %v804 = vshll.u32 %v803, 30
    %v805 = vsub.s32 %v801, %v804
    %vm806 = vcmp.lt.s32.totalorder %v805, 0
    %v807 = vsub.s32 0, %v805
    %v808 = vsel %vm806, %v807, %v805
    %v809 = vclz %v808
    %v810 = vsub.s32 %v809, 2
    %vm811 = vcmp.gt.s32.totalorder 0, %v810
    %v812 = vsel %vm811, 0, %v810
    %v813 = vsub.s32 32, %v812
    %v814 = vshll.u32 %v805, %v812
    %v815 = vshrl.u32 %v797, %v813
    %v816 = vor.u32 %v814, %v815
    %v817 = vsub.s32 4294967266, %v812
    %v818 = vadd.s32 %v817, 127
    %v819 = vshll.u32 %v818, 23
    %v820 = vor.u32 4788187, %v819
    %v821 = vand.u32 2147483647, %v820
    %v823 = vcvt.s32.f32 %v816
    %v824 = vmul.f32 %v823, %v821
    %v825 = vxor.u32 %v824, 2147483648
    %v826 = vsel %vm743, %v825, %v824
    %v827 = vsub.s32 4, %v803
    %v828 = vsel %vm743, %v827, %v803
    %v829 = vsel %vm742, %v281, %v826
    %v830 = vsel %vm742, 0, %v828
    %v831 = vcosq.f32.pop %v829
    %v832 = vsinq.f32.pop %v829
    %vm833 = vweird.f32 %v281
    %v834 = vadd.s32 %v830, 3
    %v835 = vand.u32 %v834, 3
    %vm836 = vcmp.lt.s32.totalorder %v835, 2
    %vm837 = vcmp.eq.s32.totalorder %v835, 0
    %v838 = vxor.u32 %v832, 2147483648
    %v839 = vsel %vm837, %v831, %v838
    %vm840 = vcmp.eq.s32.totalorder %v835, 2
    %v841 = vxor.u32 %v831, 2147483648
    %v842 = vsel %vm840, %v841, %v832
    %v843 = vsel %vm836, %v839, %v842
    %v844 = vsel %vm833, nan, %v843
    %v845 = vand.u32 2147483647, %v283
    %vm846 = vcmp.le.f32.partialorder %v845, 0.7853982
    %vm847 = vcmp.lt.s32.totalorder %v283, 0
    %v848 = vand.u32 %v283, 2139095040
    %v849 = vshrl.u32 %v848, 23
    %v850 = vsub.s32 %v849, 127
    %v851 = vand.u32 2147483647, %v283
    %v852 = vand.u32 %v851, 8388607
    %v853 = vor.u32 %v852, 8388608
    %v854 = vsub.s32 0, %v853
    %v855 = vadd.s32 %v850, 1
    %vm856 = vcmp.gt.s32.totalorder %v855, 0
    %v857 = vsel %vm856, %v855, 0
    %v858 = vshrl.u32 %v857, 5
    %v859 = vand.u32 %v857, 31
    %v860 = vsub.s32 32, %v859
    %v861 = vshrl.u32 683565275, %v860
    %v862 = vshll.u32 683565275, %v859
    %v863 = vshrl.u32 2475754826, %v860
    %v864 = vor.u32 %v862, %v863
    %v865 = vshll.u32 2475754826, %v859
    %v866 = vshrl.u32 2131351028, %v860
    %v867 = vor.u32 %v865, %v866
    %v868 = vshll.u32 2131351028, %v859
    %v869 = vshrl.u32 2102212464, %v860
    %v870 = vor.u32 %v868, %v869
    %v871 = vshll.u32 2102212464, %v859
    %v872 = vshrl.u32 920167782, %v860
    %v873 = vor.u32 %v871, %v872
    %v874 = vshll.u32 920167782, %v859
    %v875 = vshrl.u32 1326507024, %v860
    %v876 = vor.u32 %v874, %v875
    %vm877 = vcmp.lt.s32.totalorder %v858, 1
    %vm878 = vcmp.lt.s32.totalorder %v858, 2
    %vm879 = vcmp.lt.s32.totalorder %v858, 3
    %vm880 = vcmp.lt.s32.totalorder %v858, 4
    %v881 = vsel %vm877, %v861, %v864
    %v882 = vsel %vm880, %v870, 2102212464
    %v883 = vsel %vm879, %v867, %v882
    %v884 = vsel %vm878, %v881, %v883
    %v885 = vsel %vm877, %v864, %v867
    %v886 = vsel %vm880, %v873, 920167782
    %v887 = vsel %vm879, %v870, %v886
    %v888 = vsel %vm878, %v885, %v887
    %v889 = vsel %vm877, %v867, %v870
    %v890 = vsel %vm880, %v876, 1326507024
    %v891 = vsel %vm879, %v873, %v890
    %v892 = vsel %vm878, %v889, %v891
    %v893 = vshll.u32 %v853, 8
    %v894 = vmul.u32.u64.compose %v893, %v892
    %v895 = vextract.low.u32 %v894
    %v896 = vextract.high.u32 %v894
    %v897 = vmul.u32.u64.compose %v893, %v888
    %v898 = vextract.low.u32 %v897
    %v899 = vextract.high.u32 %v897
    %v900 = vmul.u32 %v893, %v884
    %v901 = vadd.s32 %v896, %v898
    %vm902 = vc.u32 %v896, %v898
    %v903 = vadd.s32 %v899, 1
    %v904 = vsel %vm902, %v903, %v899
    %v905 = vadd.s32 %v900, %v904
    %v906 = vadd.s32 %v905, 536870912
    %v907 = vshrl.u32 %v906, 30
    %v908 = vshll.u32 %v907, 30
    %v909 = vsub.s32 %v905, %v908
    %vm910 = vcmp.lt.s32.totalorder %v909, 0
    %v911 = vsub.s32 0, %v909
    %v912 = vsel %vm910, %v911, %v909
    %v913 = vclz %v912
    %v914 = vsub.s32 %v913, 2
    %vm915 = vcmp.gt.s32.totalorder 0, %v914
    %v916 = vsel %vm915, 0, %v914
    %v917 = vsub.s32 32, %v916
    %v918 = vshll.u32 %v909, %v916
    %v919 = vshrl.u32 %v901, %v917
    %v920 = vor.u32 %v918, %v919
    %v921 = vsub.s32 4294967266, %v916
    %v922 = vadd.s32 %v921, 127
    %v923 = vshll.u32 %v922, 23
    %v924 = vor.u32 4788187, %v923
    %v925 = vand.u32 2147483647, %v924
    %v927 = vcvt.s32.f32 %v920
    %v928 = vmul.f32 %v927, %v925
    %v929 = vxor.u32 %v928, 2147483648
    %v930 = vsel %vm847, %v929, %v928
    %v931 = vsub.s32 4, %v907
    %v932 = vsel %vm847, %v931, %v907
    %v933 = vsel %vm846, %v283, %v930
    %v934 = vsel %vm846, 0, %v932
    %v935 = vcosq.f32.pop %v933
    %v936 = vsinq.f32.pop %v933
    %vm937 = vweird.f32 %v283
    %v938 = vadd.s32 %v934, 3
    %v939 = vand.u32 %v938, 3
    %vm940 = vcmp.lt.s32.totalorder %v939, 2
    %vm941 = vcmp.eq.s32.totalorder %v939, 0
    %v942 = vxor.u32 %v936, 2147483648
    %v943 = vsel %vm941, %v935, %v942
    %vm944 = vcmp.eq.s32.totalorder %v939, 2
    %v945 = vxor.u32 %v935, 2147483648
    %v946 = vsel %vm944, %v945, %v936
    %v947 = vsel %vm940, %v943, %v946
    %v948 = vsel %vm937, nan, %v947
    %v949 = vand.u32 2147483647, %v322
    %vm950 = vcmp.le.f32.partialorder %v949, 0.7853982
    %vm951 = vcmp.lt.s32.totalorder %v322, 0
    %v952 = vand.u32 %v322, 2139095040
    %v953 = vshrl.u32 %v952, 23
    %v954 = vsub.s32 %v953, 127
    %v955 = vand.u32 2147483647, %v322
    %v956 = vand.u32 %v955, 8388607
    %v957 = vor.u32 %v956, 8388608
    %v958 = vsub.s32 0, %v957
    %v959 = vadd.s32 %v954, 1
    %vm960 = vcmp.gt.s32.totalorder %v959, 0
    %v961 = vsel %vm960, %v959, 0
    %v962 = vshrl.u32 %v961, 5
    %v963 = vand.u32 %v961, 31
    %v964 = vsub.s32 32, %v963
    %v965 = vshrl.u32 683565275, %v964
    %v966 = vshll.u32 683565275, %v963
    %v967 = vshrl.u32 2475754826, %v964
    %v968 = vor.u32 %v966, %v967
    %v969 = vshll.u32 2475754826, %v963
    %v970 = vshrl.u32 2131351028, %v964
    %v971 = vor.u32 %v969, %v970
    %v972 = vshll.u32 2131351028, %v963
    %v973 = vshrl.u32 2102212464, %v964
    %v974 = vor.u32 %v972, %v973
    %v975 = vshll.u32 2102212464, %v963
    %v976 = vshrl.u32 920167782, %v964
    %v977 = vor.u32 %v975, %v976
    %v978 = vshll.u32 920167782, %v963
    %v979 = vshrl.u32 1326507024, %v964
    %v980 = vor.u32 %v978, %v979
    %vm981 = vcmp.lt.s32.totalorder %v962, 1
    %vm982 = vcmp.lt.s32.totalorder %v962, 2
    %vm983 = vcmp.lt.s32.totalorder %v962, 3
    %vm984 = vcmp.lt.s32.totalorder %v962, 4
    %v985 = vsel %vm981, %v965, %v968
    %v986 = vsel %vm984, %v974, 2102212464
    %v987 = vsel %vm983, %v971, %v986
    %v988 = vsel %vm982, %v985, %v987
    %v989 = vsel %vm981, %v968, %v971
    %v990 = vsel %vm984, %v977, 920167782
    %v991 = vsel %vm983, %v974, %v990
    %v992 = vsel %vm982, %v989, %v991
    %v993 = vsel %vm981, %v971, %v974
    %v994 = vsel %vm984, %v980, 1326507024
    %v995 = vsel %vm983, %v977, %v994
    %v996 = vsel %vm982, %v993, %v995
    %v997 = vshll.u32 %v957, 8
    %v998 = vmul.u32.u64.compose %v997, %v996
    %v999 = vextract.low.u32 %v998
    %v1000 = vextract.high.u32 %v998
    %v1001 = vmul.u32.u64.compose %v997, %v992
    %v1002 = vextract.low.u32 %v1001
    %v1003 = vextract.high.u32 %v1001
    %v1004 = vmul.u32 %v997, %v988
    %v1005 = vadd.s32 %v1000, %v1002
    %vm1006 = vc.u32 %v1000, %v1002
    %v1007 = vadd.s32 %v1003, 1
    %v1008 = vsel %vm1006, %v1007, %v1003
    %v1009 = vadd.s32 %v1004, %v1008
    %v1010 = vadd.s32 %v1009, 536870912
    %v1011 = vshrl.u32 %v1010, 30
    %v1012 = vshll.u32 %v1011, 30
    %v1013 = vsub.s32 %v1009, %v1012
    %vm1014 = vcmp.lt.s32.totalorder %v1013, 0
    %v1015 = vsub.s32 0, %v1013
    %v1016 = vsel %vm1014, %v1015, %v1013
    %v1017 = vclz %v1016
    %v1018 = vsub.s32 %v1017, 2
    %vm1019 = vcmp.gt.s32.totalorder 0, %v1018
    %v1020 = vsel %vm1019, 0, %v1018
    %v1021 = vsub.s32 32, %v1020
    %v1022 = vshll.u32 %v1013, %v1020
    %v1023 = vshrl.u32 %v1005, %v1021
    %v1024 = vor.u32 %v1022, %v1023
    %v1025 = vsub.s32 4294967266, %v1020
    %v1026 = vadd.s32 %v1025, 127
    %v1027 = vshll.u32 %v1026, 23
    %v1028 = vor.u32 4788187, %v1027
    %v1029 = vand.u32 2147483647, %v1028
    %v1031 = vcvt.s32.f32 %v1024
    %v1032 = vmul.f32 %v1031, %v1029
    %v1033 = vxor.u32 %v1032, 2147483648
    %v1034 = vsel %vm951, %v1033, %v1032
    %v1035 = vsub.s32 4, %v1011
    %v1036 = vsel %vm951, %v1035, %v1011
    %v1037 = vsel %vm950, %v322, %v1034
    %v1038 = vsel %vm950, 0, %v1036
    %v1039 = vcosq.f32.pop %v1037
    %v1040 = vsinq.f32.pop %v1037
    %vm1041 = vweird.f32 %v322
    %v1042 = vadd.s32 %v1038, 3
    %v1043 = vand.u32 %v1042, 3
    %vm1044 = vcmp.lt.s32.totalorder %v1043, 2
    %vm1045 = vcmp.eq.s32.totalorder %v1043, 0
    %v1046 = vxor.u32 %v1040, 2147483648
    %v1047 = vsel %vm1045, %v1039, %v1046
    %vm1048 = vcmp.eq.s32.totalorder %v1043, 2
    %v1049 = vxor.u32 %v1039, 2147483648
    %v1050 = vsel %vm1048, %v1049, %v1040
    %v1051 = vsel %vm1044, %v1047, %v1050
    %v1052 = vsel %vm1041, nan, %v1051
    %v1053 = vand.u32 2147483647, %v324
    %vm1054 = vcmp.le.f32.partialorder %v1053, 0.7853982
    %vm1055 = vcmp.lt.s32.totalorder %v324, 0
    %v1056 = vand.u32 %v324, 2139095040
    %v1057 = vshrl.u32 %v1056, 23
    %v1058 = vsub.s32 %v1057, 127
    %v1059 = vand.u32 2147483647, %v324
    %v1060 = vand.u32 %v1059, 8388607
    %v1061 = vor.u32 %v1060, 8388608
    %v1062 = vsub.s32 0, %v1061
    %v1063 = vadd.s32 %v1058, 1
    %vm1064 = vcmp.gt.s32.totalorder %v1063, 0
    %v1065 = vsel %vm1064, %v1063, 0
    %v1066 = vshrl.u32 %v1065, 5
    %v1067 = vand.u32 %v1065, 31
    %v1068 = vsub.s32 32, %v1067
    %v1069 = vshrl.u32 683565275, %v1068
    %v1070 = vshll.u32 683565275, %v1067
    %v1071 = vshrl.u32 2475754826, %v1068
    %v1072 = vor.u32 %v1070, %v1071
    %v1073 = vshll.u32 2475754826, %v1067
    %v1074 = vshrl.u32 2131351028, %v1068
    %v1075 = vor.u32 %v1073, %v1074
    %v1076 = vshll.u32 2131351028, %v1067
    %v1077 = vshrl.u32 2102212464, %v1068
    %v1078 = vor.u32 %v1076, %v1077
    %v1079 = vshll.u32 2102212464, %v1067
    %v1080 = vshrl.u32 920167782, %v1068
    %v1081 = vor.u32 %v1079, %v1080
    %v1082 = vshll.u32 920167782, %v1067
    %v1083 = vshrl.u32 1326507024, %v1068
    %v1084 = vor.u32 %v1082, %v1083
    %vm1085 = vcmp.lt.s32.totalorder %v1066, 1
    %vm1086 = vcmp.lt.s32.totalorder %v1066, 2
    %vm1087 = vcmp.lt.s32.totalorder %v1066, 3
    %vm1088 = vcmp.lt.s32.totalorder %v1066, 4
    %v1089 = vsel %vm1085, %v1069, %v1072
    %v1090 = vsel %vm1088, %v1078, 2102212464
    %v1091 = vsel %vm1087, %v1075, %v1090
    %v1092 = vsel %vm1086, %v1089, %v1091
    %v1093 = vsel %vm1085, %v1072, %v1075
    %v1094 = vsel %vm1088, %v1081, 920167782
    %v1095 = vsel %vm1087, %v1078, %v1094
    %v1096 = vsel %vm1086, %v1093, %v1095
    %v1097 = vsel %vm1085, %v1075, %v1078
    %v1098 = vsel %vm1088, %v1084, 1326507024
    %v1099 = vsel %vm1087, %v1081, %v1098
    %v1100 = vsel %vm1086, %v1097, %v1099
    %v1101 = vshll.u32 %v1061, 8
    %v1102 = vmul.u32.u64.compose %v1101, %v1100
    %v1103 = vextract.low.u32 %v1102
    %v1104 = vextract.high.u32 %v1102
    %v1105 = vmul.u32.u64.compose %v1101, %v1096
    %v1106 = vextract.low.u32 %v1105
    %v1107 = vextract.high.u32 %v1105
    %v1108 = vmul.u32 %v1101, %v1092
    %v1109 = vadd.s32 %v1104, %v1106
    %vm1110 = vc.u32 %v1104, %v1106
    %v1111 = vadd.s32 %v1107, 1
    %v1112 = vsel %vm1110, %v1111, %v1107
    %v1113 = vadd.s32 %v1108, %v1112
    %v1114 = vadd.s32 %v1113, 536870912
    %v1115 = vshrl.u32 %v1114, 30
    %v1116 = vshll.u32 %v1115, 30
    %v1117 = vsub.s32 %v1113, %v1116
    %vm1118 = vcmp.lt.s32.totalorder %v1117, 0
    %v1119 = vsub.s32 0, %v1117
    %v1120 = vsel %vm1118, %v1119, %v1117
    %v1121 = vclz %v1120
    %v1122 = vsub.s32 %v1121, 2
    %vm1123 = vcmp.gt.s32.totalorder 0, %v1122
    %v1124 = vsel %vm1123, 0, %v1122
    %v1125 = vsub.s32 32, %v1124
    %v1126 = vshll.u32 %v1117, %v1124
    %v1127 = vshrl.u32 %v1109, %v1125
    %v1128 = vor.u32 %v1126, %v1127
    %v1129 = vsub.s32 4294967266, %v1124
    %v1130 = vadd.s32 %v1129, 127
    %v1131 = vshll.u32 %v1130, 23
    %v1132 = vor.u32 4788187, %v1131
    %v1133 = vand.u32 2147483647, %v1132
    %v1135 = vcvt.s32.f32 %v1128
    %v1136 = vmul.f32 %v1135, %v1133
    %v1137 = vxor.u32 %v1136, 2147483648
    %v1138 = vsel %vm1055, %v1137, %v1136
    %v1139 = vsub.s32 4, %v1115
    %v1140 = vsel %vm1055, %v1139, %v1115
    %v1141 = vsel %vm1054, %v324, %v1138
    %v1142 = vsel %vm1054, 0, %v1140
    %v1143 = vcosq.f32.pop %v1141
    %v1144 = vsinq.f32.pop %v1141
    %vm1145 = vweird.f32 %v324
    %v1146 = vadd.s32 %v1142, 3
    %v1147 = vand.u32 %v1146, 3
    %vm1148 = vcmp.lt.s32.totalorder %v1147, 2
    %vm1149 = vcmp.eq.s32.totalorder %v1147, 0
    %v1150 = vxor.u32 %v1144, 2147483648
    %v1151 = vsel %vm1149, %v1143, %v1150
    %vm1152 = vcmp.eq.s32.totalorder %v1147, 2
    %v1153 = vxor.u32 %v1143, 2147483648
    %v1154 = vsel %vm1152, %v1153, %v1144
    %v1155 = vsel %vm1148, %v1151, %v1154
    %v1156 = vsel %vm1145, nan, %v1155
    %v1157 = vand.u32 2147483647, %v363
    %vm1158 = vcmp.le.f32.partialorder %v1157, 0.7853982
    %vm1159 = vcmp.lt.s32.totalorder %v363, 0
    %v1160 = vand.u32 %v363, 2139095040
    %v1161 = vshrl.u32 %v1160, 23
    %v1162 = vsub.s32 %v1161, 127
    %v1163 = vand.u32 2147483647, %v363
    %v1164 = vand.u32 %v1163, 8388607
    %v1165 = vor.u32 %v1164, 8388608
    %v1166 = vsub.s32 0, %v1165
    %v1167 = vadd.s32 %v1162, 1
    %vm1168 = vcmp.gt.s32.totalorder %v1167, 0
    %v1169 = vsel %vm1168, %v1167, 0
    %v1170 = vshrl.u32 %v1169, 5
    %v1171 = vand.u32 %v1169, 31
    %v1172 = vsub.s32 32, %v1171
    %v1173 = vshrl.u32 683565275, %v1172
    %v1174 = vshll.u32 683565275, %v1171
    %v1175 = vshrl.u32 2475754826, %v1172
    %v1176 = vor.u32 %v1174, %v1175
    %v1177 = vshll.u32 2475754826, %v1171
    %v1178 = vshrl.u32 2131351028, %v1172
    %v1179 = vor.u32 %v1177, %v1178
    %v1180 = vshll.u32 2131351028, %v1171
    %v1181 = vshrl.u32 2102212464, %v1172
    %v1182 = vor.u32 %v1180, %v1181
    %v1183 = vshll.u32 2102212464, %v1171
    %v1184 = vshrl.u32 920167782, %v1172
    %v1185 = vor.u32 %v1183, %v1184
    %v1186 = vshll.u32 920167782, %v1171
    %v1187 = vshrl.u32 1326507024, %v1172
    %v1188 = vor.u32 %v1186, %v1187
    %vm1189 = vcmp.lt.s32.totalorder %v1170, 1
    %vm1190 = vcmp.lt.s32.totalorder %v1170, 2
    %vm1191 = vcmp.lt.s32.totalorder %v1170, 3
    %vm1192 = vcmp.lt.s32.totalorder %v1170, 4
    %v1193 = vsel %vm1189, %v1173, %v1176
    %v1194 = vsel %vm1192, %v1182, 2102212464
    %v1195 = vsel %vm1191, %v1179, %v1194
    %v1196 = vsel %vm1190, %v1193, %v1195
    %v1197 = vsel %vm1189, %v1176, %v1179
    %v1198 = vsel %vm1192, %v1185, 920167782
    %v1199 = vsel %vm1191, %v1182, %v1198
    %v1200 = vsel %vm1190, %v1197, %v1199
    %v1201 = vsel %vm1189, %v1179, %v1182
    %v1202 = vsel %vm1192, %v1188, 1326507024
    %v1203 = vsel %vm1191, %v1185, %v1202
    %v1204 = vsel %vm1190, %v1201, %v1203
    %v1205 = vshll.u32 %v1165, 8
    %v1206 = vmul.u32.u64.compose %v1205, %v1204
    %v1207 = vextract.low.u32 %v1206
    %v1208 = vextract.high.u32 %v1206
    %v1209 = vmul.u32.u64.compose %v1205, %v1200
    %v1210 = vextract.low.u32 %v1209
    %v1211 = vextract.high.u32 %v1209
    %v1212 = vmul.u32 %v1205, %v1196
    %v1213 = vadd.s32 %v1208, %v1210
    %vm1214 = vc.u32 %v1208, %v1210
    %v1215 = vadd.s32 %v1211, 1
    %v1216 = vsel %vm1214, %v1215, %v1211
    %v1217 = vadd.s32 %v1212, %v1216
    %v1218 = vadd.s32 %v1217, 536870912
    %v1219 = vshrl.u32 %v1218, 30
    %v1220 = vshll.u32 %v1219, 30
    %v1221 = vsub.s32 %v1217, %v1220
    %vm1222 = vcmp.lt.s32.totalorder %v1221, 0
    %v1223 = vsub.s32 0, %v1221
    %v1224 = vsel %vm1222, %v1223, %v1221
    %v1225 = vclz %v1224
    %v1226 = vsub.s32 %v1225, 2
    %vm1227 = vcmp.gt.s32.totalorder 0, %v1226
    %v1228 = vsel %vm1227, 0, %v1226
    %v1229 = vsub.s32 32, %v1228
    %v1230 = vshll.u32 %v1221, %v1228
    %v1231 = vshrl.u32 %v1213, %v1229
    %v1232 = vor.u32 %v1230, %v1231
    %v1233 = vsub.s32 4294967266, %v1228
    %v1234 = vadd.s32 %v1233, 127
    %v1235 = vshll.u32 %v1234, 23
    %v1236 = vor.u32 4788187, %v1235
    %v1237 = vand.u32 2147483647, %v1236
    %v1239 = vcvt.s32.f32 %v1232
    %v1240 = vmul.f32 %v1239, %v1237
    %v1241 = vxor.u32 %v1240, 2147483648
    %v1242 = vsel %vm1159, %v1241, %v1240
    %v1243 = vsub.s32 4, %v1219
    %v1244 = vsel %vm1159, %v1243, %v1219
    %v1245 = vsel %vm1158, %v363, %v1242
    %v1246 = vsel %vm1158, 0, %v1244
    %v1247 = vcosq.f32.pop %v1245
    %v1248 = vsinq.f32.pop %v1245
    %vm1249 = vweird.f32 %v363
    %v1250 = vadd.s32 %v1246, 3
    %v1251 = vand.u32 %v1250, 3
    %vm1252 = vcmp.lt.s32.totalorder %v1251, 2
    %vm1253 = vcmp.eq.s32.totalorder %v1251, 0
    %v1254 = vxor.u32 %v1248, 2147483648
    %v1255 = vsel %vm1253, %v1247, %v1254
    %vm1256 = vcmp.eq.s32.totalorder %v1251, 2
    %v1257 = vxor.u32 %v1247, 2147483648
    %v1258 = vsel %vm1256, %v1257, %v1248
    %v1259 = vsel %vm1252, %v1255, %v1258
    %v1260 = vsel %vm1249, nan, %v1259
    %v1261 = vand.u32 2147483647, %v365
    %vm1262 = vcmp.le.f32.partialorder %v1261, 0.7853982
    %vm1263 = vcmp.lt.s32.totalorder %v365, 0
    %v1264 = vand.u32 %v365, 2139095040
    %v1265 = vshrl.u32 %v1264, 23
    %v1266 = vsub.s32 %v1265, 127
    %v1267 = vand.u32 2147483647, %v365
    %v1268 = vand.u32 %v1267, 8388607
    %v1269 = vor.u32 %v1268, 8388608
    %v1270 = vsub.s32 0, %v1269
    %v1271 = vadd.s32 %v1266, 1
    %vm1272 = vcmp.gt.s32.totalorder %v1271, 0
    %v1273 = vsel %vm1272, %v1271, 0
    %v1274 = vshrl.u32 %v1273, 5
    %v1275 = vand.u32 %v1273, 31
    %v1276 = vsub.s32 32, %v1275
    %v1277 = vshrl.u32 683565275, %v1276
    %v1278 = vshll.u32 683565275, %v1275
    %v1279 = vshrl.u32 2475754826, %v1276
    %v1280 = vor.u32 %v1278, %v1279
    %v1281 = vshll.u32 2475754826, %v1275
    %v1282 = vshrl.u32 2131351028, %v1276
    %v1283 = vor.u32 %v1281, %v1282
    %v1284 = vshll.u32 2131351028, %v1275
    %v1285 = vshrl.u32 2102212464, %v1276
    %v1286 = vor.u32 %v1284, %v1285
    %v1287 = vshll.u32 2102212464, %v1275
    %v1288 = vshrl.u32 920167782, %v1276
    %v1289 = vor.u32 %v1287, %v1288
    %v1290 = vshll.u32 920167782, %v1275
    %v1291 = vshrl.u32 1326507024, %v1276
    %v1292 = vor.u32 %v1290, %v1291
    %vm1293 = vcmp.lt.s32.totalorder %v1274, 1
    %vm1294 = vcmp.lt.s32.totalorder %v1274, 2
    %vm1295 = vcmp.lt.s32.totalorder %v1274, 3
    %vm1296 = vcmp.lt.s32.totalorder %v1274, 4
    %v1297 = vsel %vm1293, %v1277, %v1280
    %v1298 = vsel %vm1296, %v1286, 2102212464
    %v1299 = vsel %vm1295, %v1283, %v1298
    %v1300 = vsel %vm1294, %v1297, %v1299
    %v1301 = vsel %vm1293, %v1280, %v1283
    %v1302 = vsel %vm1296, %v1289, 920167782
    %v1303 = vsel %vm1295, %v1286, %v1302
    %v1304 = vsel %vm1294, %v1301, %v1303
    %v1305 = vsel %vm1293, %v1283, %v1286
    %v1306 = vsel %vm1296, %v1292, 1326507024
    %v1307 = vsel %vm1295, %v1289, %v1306
    %v1308 = vsel %vm1294, %v1305, %v1307
    %v1309 = vshll.u32 %v1269, 8
    %v1310 = vmul.u32.u64.compose %v1309, %v1308
    %v1311 = vextract.low.u32 %v1310
    %v1312 = vextract.high.u32 %v1310
    %v1313 = vmul.u32.u64.compose %v1309, %v1304
    %v1314 = vextract.low.u32 %v1313
    %v1315 = vextract.high.u32 %v1313
    %v1316 = vmul.u32 %v1309, %v1300
    %v1317 = vadd.s32 %v1312, %v1314
    %vm1318 = vc.u32 %v1312, %v1314
    %v1319 = vadd.s32 %v1315, 1
    %v1320 = vsel %vm1318, %v1319, %v1315
    %v1321 = vadd.s32 %v1316, %v1320
    %v1322 = vadd.s32 %v1321, 536870912
    %v1323 = vshrl.u32 %v1322, 30
    %v1324 = vshll.u32 %v1323, 30
    %v1325 = vsub.s32 %v1321, %v1324
    %vm1326 = vcmp.lt.s32.totalorder %v1325, 0
    %v1327 = vsub.s32 0, %v1325
    %v1328 = vsel %vm1326, %v1327, %v1325
    %v1329 = vclz %v1328
    %v1330 = vsub.s32 %v1329, 2
    %vm1331 = vcmp.gt.s32.totalorder 0, %v1330
    %v1332 = vsel %vm1331, 0, %v1330
    %v1333 = vsub.s32 32, %v1332
    %v1334 = vshll.u32 %v1325, %v1332
    %v1335 = vshrl.u32 %v1317, %v1333
    %v1336 = vor.u32 %v1334, %v1335
    %v1337 = vsub.s32 4294967266, %v1332
    %v1338 = vadd.s32 %v1337, 127
    %v1339 = vshll.u32 %v1338, 23
    %v1340 = vor.u32 4788187, %v1339
    %v1341 = vand.u32 2147483647, %v1340
    %v1343 = vcvt.s32.f32 %v1336
    %v1344 = vmul.f32 %v1343, %v1341
    %v1345 = vxor.u32 %v1344, 2147483648
    %v1346 = vsel %vm1263, %v1345, %v1344
    %v1347 = vsub.s32 4, %v1323
    %v1348 = vsel %vm1263, %v1347, %v1323
    %v1349 = vsel %vm1262, %v365, %v1346
    %v1350 = vsel %vm1262, 0, %v1348
    %v1351 = vcosq.f32.pop %v1349
    %v1352 = vsinq.f32.pop %v1349
    %vm1353 = vweird.f32 %v365
    %v1354 = vadd.s32 %v1350, 3
    %v1355 = vand.u32 %v1354, 3
    %vm1356 = vcmp.lt.s32.totalorder %v1355, 2
    %vm1357 = vcmp.eq.s32.totalorder %v1355, 0
    %v1358 = vxor.u32 %v1352, 2147483648
    %v1359 = vsel %vm1357, %v1351, %v1358
    %vm1360 = vcmp.eq.s32.totalorder %v1355, 2
    %v1361 = vxor.u32 %v1351, 2147483648
    %v1362 = vsel %vm1360, %v1361, %v1352
    %v1363 = vsel %vm1356, %v1359, %v1362
    %v1364 = vsel %vm1353, nan, %v1363
    %v1365 = vand.u32 2147483647, %v404
    %vm1366 = vcmp.le.f32.partialorder %v1365, 0.7853982
    %vm1367 = vcmp.lt.s32.totalorder %v404, 0
    %v1368 = vand.u32 %v404, 2139095040
    %v1369 = vshrl.u32 %v1368, 23
    %v1370 = vsub.s32 %v1369, 127
    %v1371 = vand.u32 2147483647, %v404
    %v1372 = vand.u32 %v1371, 8388607
    %v1373 = vor.u32 %v1372, 8388608
    %v1374 = vsub.s32 0, %v1373
    %v1375 = vadd.s32 %v1370, 1
    %vm1376 = vcmp.gt.s32.totalorder %v1375, 0
    %v1377 = vsel %vm1376, %v1375, 0
    %v1378 = vshrl.u32 %v1377, 5
    %v1379 = vand.u32 %v1377, 31
    %v1380 = vsub.s32 32, %v1379
    %v1381 = vshrl.u32 683565275, %v1380
    %v1382 = vshll.u32 683565275, %v1379
    %v1383 = vshrl.u32 2475754826, %v1380
    %v1384 = vor.u32 %v1382, %v1383
    %v1385 = vshll.u32 2475754826, %v1379
    %v1386 = vshrl.u32 2131351028, %v1380
    %v1387 = vor.u32 %v1385, %v1386
    %v1388 = vshll.u32 2131351028, %v1379
    %v1389 = vshrl.u32 2102212464, %v1380
    %v1390 = vor.u32 %v1388, %v1389
    %v1391 = vshll.u32 2102212464, %v1379
    %v1392 = vshrl.u32 920167782, %v1380
    %v1393 = vor.u32 %v1391, %v1392
    %v1394 = vshll.u32 920167782, %v1379
    %v1395 = vshrl.u32 1326507024, %v1380
    %v1396 = vor.u32 %v1394, %v1395
    %vm1397 = vcmp.lt.s32.totalorder %v1378, 1
    %vm1398 = vcmp.lt.s32.totalorder %v1378, 2
    %vm1399 = vcmp.lt.s32.totalorder %v1378, 3
    %vm1400 = vcmp.lt.s32.totalorder %v1378, 4
    %v1401 = vsel %vm1397, %v1381, %v1384
    %v1402 = vsel %vm1400, %v1390, 2102212464
    %v1403 = vsel %vm1399, %v1387, %v1402
    %v1404 = vsel %vm1398, %v1401, %v1403
    %v1405 = vsel %vm1397, %v1384, %v1387
    %v1406 = vsel %vm1400, %v1393, 920167782
    %v1407 = vsel %vm1399, %v1390, %v1406
    %v1408 = vsel %vm1398, %v1405, %v1407
    %v1409 = vsel %vm1397, %v1387, %v1390
    %v1410 = vsel %vm1400, %v1396, 1326507024
    %v1411 = vsel %vm1399, %v1393, %v1410
    %v1412 = vsel %vm1398, %v1409, %v1411
    %v1413 = vshll.u32 %v1373, 8
    %v1414 = vmul.u32.u64.compose %v1413, %v1412
    %v1415 = vextract.low.u32 %v1414
    %v1416 = vextract.high.u32 %v1414
    %v1417 = vmul.u32.u64.compose %v1413, %v1408
    %v1418 = vextract.low.u32 %v1417
    %v1419 = vextract.high.u32 %v1417
    %v1420 = vmul.u32 %v1413, %v1404
    %v1421 = vadd.s32 %v1416, %v1418
    %vm1422 = vc.u32 %v1416, %v1418
    %v1423 = vadd.s32 %v1419, 1
    %v1424 = vsel %vm1422, %v1423, %v1419
    %v1425 = vadd.s32 %v1420, %v1424
    %v1426 = vadd.s32 %v1425, 536870912
    %v1427 = vshrl.u32 %v1426, 30
    %v1428 = vshll.u32 %v1427, 30
    %v1429 = vsub.s32 %v1425, %v1428
    %vm1430 = vcmp.lt.s32.totalorder %v1429, 0
    %v1431 = vsub.s32 0, %v1429
    %v1432 = vsel %vm1430, %v1431, %v1429
    %v1433 = vclz %v1432
    %v1434 = vsub.s32 %v1433, 2
    %vm1435 = vcmp.gt.s32.totalorder 0, %v1434
    %v1436 = vsel %vm1435, 0, %v1434
    %v1437 = vsub.s32 32, %v1436
    %v1438 = vshll.u32 %v1429, %v1436
    %v1439 = vshrl.u32 %v1421, %v1437
    %v1440 = vor.u32 %v1438, %v1439
    %v1441 = vsub.s32 4294967266, %v1436
    %v1442 = vadd.s32 %v1441, 127
    %v1443 = vshll.u32 %v1442, 23
    %v1444 = vor.u32 4788187, %v1443
    %v1445 = vand.u32 2147483647, %v1444
    %v1447 = vcvt.s32.f32 %v1440
    %v1448 = vmul.f32 %v1447, %v1445
    %v1449 = vxor.u32 %v1448, 2147483648
    %v1450 = vsel %vm1367, %v1449, %v1448
    %v1451 = vsub.s32 4, %v1427
    %v1452 = vsel %vm1367, %v1451, %v1427
    %v1453 = vsel %vm1366, %v404, %v1450
    %v1454 = vsel %vm1366, 0, %v1452
    %v1455 = vcosq.f32.pop %v1453
    %v1456 = vsinq.f32.pop %v1453
    %vm1457 = vweird.f32 %v404
    %v1458 = vadd.s32 %v1454, 3
    %v1459 = vand.u32 %v1458, 3
    %vm1460 = vcmp.lt.s32.totalorder %v1459, 2
    %vm1461 = vcmp.eq.s32.totalorder %v1459, 0
    %v1462 = vxor.u32 %v1456, 2147483648
    %v1463 = vsel %vm1461, %v1455, %v1462
    %vm1464 = vcmp.eq.s32.totalorder %v1459, 2
    %v1465 = vxor.u32 %v1455, 2147483648
    %v1466 = vsel %vm1464, %v1465, %v1456
    %v1467 = vsel %vm1460, %v1463, %v1466
    %v1468 = vsel %vm1457, nan, %v1467
    %v1469 = vand.u32 2147483647, %v406
    %vm1470 = vcmp.le.f32.partialorder %v1469, 0.7853982
    %vm1471 = vcmp.lt.s32.totalorder %v406, 0
    %v1472 = vand.u32 %v406, 2139095040
    %v1473 = vshrl.u32 %v1472, 23
    %v1474 = vsub.s32 %v1473, 127
    %v1475 = vand.u32 2147483647, %v406
    %v1476 = vand.u32 %v1475, 8388607
    %v1477 = vor.u32 %v1476, 8388608
    %v1478 = vsub.s32 0, %v1477
    %v1479 = vadd.s32 %v1474, 1
    %vm1480 = vcmp.gt.s32.totalorder %v1479, 0
    %v1481 = vsel %vm1480, %v1479, 0
    %v1482 = vshrl.u32 %v1481, 5
    %v1483 = vand.u32 %v1481, 31
    %v1484 = vsub.s32 32, %v1483
    %v1485 = vshrl.u32 683565275, %v1484
    %v1486 = vshll.u32 683565275, %v1483
    %v1487 = vshrl.u32 2475754826, %v1484
    %v1488 = vor.u32 %v1486, %v1487
    %v1489 = vshll.u32 2475754826, %v1483
    %v1490 = vshrl.u32 2131351028, %v1484
    %v1491 = vor.u32 %v1489, %v1490
    %v1492 = vshll.u32 2131351028, %v1483
    %v1493 = vshrl.u32 2102212464, %v1484
    %v1494 = vor.u32 %v1492, %v1493
    %v1495 = vshll.u32 2102212464, %v1483
    %v1496 = vshrl.u32 920167782, %v1484
    %v1497 = vor.u32 %v1495, %v1496
    %v1498 = vshll.u32 920167782, %v1483
    %v1499 = vshrl.u32 1326507024, %v1484
    %v1500 = vor.u32 %v1498, %v1499
    %vm1501 = vcmp.lt.s32.totalorder %v1482, 1
    %vm1502 = vcmp.lt.s32.totalorder %v1482, 2
    %vm1503 = vcmp.lt.s32.totalorder %v1482, 3
    %vm1504 = vcmp.lt.s32.totalorder %v1482, 4
    %v1505 = vsel %vm1501, %v1485, %v1488
    %v1506 = vsel %vm1504, %v1494, 2102212464
    %v1507 = vsel %vm1503, %v1491, %v1506
    %v1508 = vsel %vm1502, %v1505, %v1507
    %v1509 = vsel %vm1501, %v1488, %v1491
    %v1510 = vsel %vm1504, %v1497, 920167782
    %v1511 = vsel %vm1503, %v1494, %v1510
    %v1512 = vsel %vm1502, %v1509, %v1511
    %v1513 = vsel %vm1501, %v1491, %v1494
    %v1514 = vsel %vm1504, %v1500, 1326507024
    %v1515 = vsel %vm1503, %v1497, %v1514
    %v1516 = vsel %vm1502, %v1513, %v1515
    %v1517 = vshll.u32 %v1477, 8
    %v1518 = vmul.u32.u64.compose %v1517, %v1516
    %v1519 = vextract.low.u32 %v1518
    %v1520 = vextract.high.u32 %v1518
    %v1521 = vmul.u32.u64.compose %v1517, %v1512
    %v1522 = vextract.low.u32 %v1521
    %v1523 = vextract.high.u32 %v1521
    %v1524 = vmul.u32 %v1517, %v1508
    %v1525 = vadd.s32 %v1520, %v1522
    %vm1526 = vc.u32 %v1520, %v1522
    %v1527 = vadd.s32 %v1523, 1
    %v1528 = vsel %vm1526, %v1527, %v1523
    %v1529 = vadd.s32 %v1524, %v1528
    %v1530 = vadd.s32 %v1529, 536870912
    %v1531 = vshrl.u32 %v1530, 30
    %v1532 = vshll.u32 %v1531, 30
    %v1533 = vsub.s32 %v1529, %v1532
    %vm1534 = vcmp.lt.s32.totalorder %v1533, 0
    %v1535 = vsub.s32 0, %v1533
    %v1536 = vsel %vm1534, %v1535, %v1533
    %v1537 = vclz %v1536
    %v1538 = vsub.s32 %v1537, 2
    %vm1539 = vcmp.gt.s32.totalorder 0, %v1538
    %v1540 = vsel %vm1539, 0, %v1538
    %v1541 = vsub.s32 32, %v1540
    %v1542 = vshll.u32 %v1533, %v1540
    %v1543 = vshrl.u32 %v1525, %v1541
    %v1544 = vor.u32 %v1542, %v1543
    %v1545 = vsub.s32 4294967266, %v1540
    %v1546 = vadd.s32 %v1545, 127
    %v1547 = vshll.u32 %v1546, 23
    %v1548 = vor.u32 4788187, %v1547
    %v1549 = vand.u32 2147483647, %v1548
    %v1551 = vcvt.s32.f32 %v1544
    %v1552 = vmul.f32 %v1551, %v1549
    %v1553 = vxor.u32 %v1552, 2147483648
    %v1554 = vsel %vm1471, %v1553, %v1552
    %v1555 = vsub.s32 4, %v1531
    %v1556 = vsel %vm1471, %v1555, %v1531
    %v1557 = vsel %vm1470, %v406, %v1554
    %v1558 = vsel %vm1470, 0, %v1556
    %v1559 = vcosq.f32.pop %v1557
    %v1560 = vsinq.f32.pop %v1557
    %vm1561 = vweird.f32 %v406
    %v1562 = vadd.s32 %v1558, 3
    %v1563 = vand.u32 %v1562, 3
    %vm1564 = vcmp.lt.s32.totalorder %v1563, 2
    %vm1565 = vcmp.eq.s32.totalorder %v1563, 0
    %v1566 = vxor.u32 %v1560, 2147483648
    %v1567 = vsel %vm1565, %v1559, %v1566
    %vm1568 = vcmp.eq.s32.totalorder %v1563, 2
    %v1569 = vxor.u32 %v1559, 2147483648
    %v1570 = vsel %vm1568, %v1569, %v1560
    %v1571 = vsel %vm1564, %v1567, %v1570
    %v1572 = vsel %vm1561, nan, %v1571
    %v1573 = vand.u32 2147483647, %v445
    %vm1574 = vcmp.le.f32.partialorder %v1573, 0.7853982
    %vm1575 = vcmp.lt.s32.totalorder %v445, 0
    %v1576 = vand.u32 %v445, 2139095040
    %v1577 = vshrl.u32 %v1576, 23
    %v1578 = vsub.s32 %v1577, 127
    %v1579 = vand.u32 2147483647, %v445
    %v1580 = vand.u32 %v1579, 8388607
    %v1581 = vor.u32 %v1580, 8388608
    %v1582 = vsub.s32 0, %v1581
    %v1583 = vadd.s32 %v1578, 1
    %vm1584 = vcmp.gt.s32.totalorder %v1583, 0
    %v1585 = vsel %vm1584, %v1583, 0
    %v1586 = vshrl.u32 %v1585, 5
    %v1587 = vand.u32 %v1585, 31
    %v1588 = vsub.s32 32, %v1587
    %v1589 = vshrl.u32 683565275, %v1588
    %v1590 = vshll.u32 683565275, %v1587
    %v1591 = vshrl.u32 2475754826, %v1588
    %v1592 = vor.u32 %v1590, %v1591
    %v1593 = vshll.u32 2475754826, %v1587
    %v1594 = vshrl.u32 2131351028, %v1588
    %v1595 = vor.u32 %v1593, %v1594
    %v1596 = vshll.u32 2131351028, %v1587
    %v1597 = vshrl.u32 2102212464, %v1588
    %v1598 = vor.u32 %v1596, %v1597
    %v1599 = vshll.u32 2102212464, %v1587
    %v1600 = vshrl.u32 920167782, %v1588
    %v1601 = vor.u32 %v1599, %v1600
    %v1602 = vshll.u32 920167782, %v1587
    %v1603 = vshrl.u32 1326507024, %v1588
    %v1604 = vor.u32 %v1602, %v1603
    %vm1605 = vcmp.lt.s32.totalorder %v1586, 1
    %vm1606 = vcmp.lt.s32.totalorder %v1586, 2
    %vm1607 = vcmp.lt.s32.totalorder %v1586, 3
    %vm1608 = vcmp.lt.s32.totalorder %v1586, 4
    %v1609 = vsel %vm1605, %v1589, %v1592
    %v1610 = vsel %vm1608, %v1598, 2102212464
    %v1611 = vsel %vm1607, %v1595, %v1610
    %v1612 = vsel %vm1606, %v1609, %v1611
    %v1613 = vsel %vm1605, %v1592, %v1595
    %v1614 = vsel %vm1608, %v1601, 920167782
    %v1615 = vsel %vm1607, %v1598, %v1614
    %v1616 = vsel %vm1606, %v1613, %v1615
    %v1617 = vsel %vm1605, %v1595, %v1598
    %v1618 = vsel %vm1608, %v1604, 1326507024
    %v1619 = vsel %vm1607, %v1601, %v1618
    %v1620 = vsel %vm1606, %v1617, %v1619
    %v1621 = vshll.u32 %v1581, 8
    %v1622 = vmul.u32.u64.compose %v1621, %v1620
    %v1623 = vextract.low.u32 %v1622
    %v1624 = vextract.high.u32 %v1622
    %v1625 = vmul.u32.u64.compose %v1621, %v1616
    %v1626 = vextract.low.u32 %v1625
    %v1627 = vextract.high.u32 %v1625
    %v1628 = vmul.u32 %v1621, %v1612
    %v1629 = vadd.s32 %v1624, %v1626
    %vm1630 = vc.u32 %v1624, %v1626
    %v1631 = vadd.s32 %v1627, 1
    %v1632 = vsel %vm1630, %v1631, %v1627
    %v1633 = vadd.s32 %v1628, %v1632
    %v1634 = vadd.s32 %v1633, 536870912
    %v1635 = vshrl.u32 %v1634, 30
    %v1636 = vshll.u32 %v1635, 30
    %v1637 = vsub.s32 %v1633, %v1636
    %vm1638 = vcmp.lt.s32.totalorder %v1637, 0
    %v1639 = vsub.s32 0, %v1637
    %v1640 = vsel %vm1638, %v1639, %v1637
    %v1641 = vclz %v1640
    %v1642 = vsub.s32 %v1641, 2
    %vm1643 = vcmp.gt.s32.totalorder 0, %v1642
    %v1644 = vsel %vm1643, 0, %v1642
    %v1645 = vsub.s32 32, %v1644
    %v1646 = vshll.u32 %v1637, %v1644
    %v1647 = vshrl.u32 %v1629, %v1645
    %v1648 = vor.u32 %v1646, %v1647
    %v1649 = vsub.s32 4294967266, %v1644
    %v1650 = vadd.s32 %v1649, 127
    %v1651 = vshll.u32 %v1650, 23
    %v1652 = vor.u32 4788187, %v1651
    %v1653 = vand.u32 2147483647, %v1652
    %v1655 = vcvt.s32.f32 %v1648
    %v1656 = vmul.f32 %v1655, %v1653
    %v1657 = vxor.u32 %v1656, 2147483648
    %v1658 = vsel %vm1575, %v1657, %v1656
    %v1659 = vsub.s32 4, %v1635
    %v1660 = vsel %vm1575, %v1659, %v1635
    %v1661 = vsel %vm1574, %v445, %v1658
    %v1662 = vsel %vm1574, 0, %v1660
    %v1663 = vcosq.f32.pop %v1661
    %v1664 = vsinq.f32.pop %v1661
    %vm1665 = vweird.f32 %v445
    %v1666 = vadd.s32 %v1662, 3
    %v1667 = vand.u32 %v1666, 3
    %vm1668 = vcmp.lt.s32.totalorder %v1667, 2
    %vm1669 = vcmp.eq.s32.totalorder %v1667, 0
    %v1670 = vxor.u32 %v1664, 2147483648
    %v1671 = vsel %vm1669, %v1663, %v1670
    %vm1672 = vcmp.eq.s32.totalorder %v1667, 2
    %v1673 = vxor.u32 %v1663, 2147483648
    %v1674 = vsel %vm1672, %v1673, %v1664
    %v1675 = vsel %vm1668, %v1671, %v1674
    %v1676 = vsel %vm1665, nan, %v1675
    %v1677 = vand.u32 2147483647, %v447
    %vm1678 = vcmp.le.f32.partialorder %v1677, 0.7853982
    %vm1679 = vcmp.lt.s32.totalorder %v447, 0
    %v1680 = vand.u32 %v447, 2139095040
    %v1681 = vshrl.u32 %v1680, 23
    %v1682 = vsub.s32 %v1681, 127
    %v1683 = vand.u32 2147483647, %v447
    %v1684 = vand.u32 %v1683, 8388607
    %v1685 = vor.u32 %v1684, 8388608
    %v1686 = vsub.s32 0, %v1685
    %v1687 = vadd.s32 %v1682, 1
    %vm1688 = vcmp.gt.s32.totalorder %v1687, 0
    %v1689 = vsel %vm1688, %v1687, 0
    %v1690 = vshrl.u32 %v1689, 5
    %v1691 = vand.u32 %v1689, 31
    %v1692 = vsub.s32 32, %v1691
    %v1693 = vshrl.u32 683565275, %v1692
    %v1694 = vshll.u32 683565275, %v1691
    %v1695 = vshrl.u32 2475754826, %v1692
    %v1696 = vor.u32 %v1694, %v1695
    %v1697 = vshll.u32 2475754826, %v1691
    %v1698 = vshrl.u32 2131351028, %v1692
    %v1699 = vor.u32 %v1697, %v1698
    %v1700 = vshll.u32 2131351028, %v1691
    %v1701 = vshrl.u32 2102212464, %v1692
    %v1702 = vor.u32 %v1700, %v1701
    %v1703 = vshll.u32 2102212464, %v1691
    %v1704 = vshrl.u32 920167782, %v1692
    %v1705 = vor.u32 %v1703, %v1704
    %v1706 = vshll.u32 920167782, %v1691
    %v1707 = vshrl.u32 1326507024, %v1692
    %v1708 = vor.u32 %v1706, %v1707
    %vm1709 = vcmp.lt.s32.totalorder %v1690, 1
    %vm1710 = vcmp.lt.s32.totalorder %v1690, 2
    %vm1711 = vcmp.lt.s32.totalorder %v1690, 3
    %vm1712 = vcmp.lt.s32.totalorder %v1690, 4
    %v1713 = vsel %vm1709, %v1693, %v1696
    %v1714 = vsel %vm1712, %v1702, 2102212464
    %v1715 = vsel %vm1711, %v1699, %v1714
    %v1716 = vsel %vm1710, %v1713, %v1715
    %v1717 = vsel %vm1709, %v1696, %v1699
    %v1718 = vsel %vm1712, %v1705, 920167782
    %v1719 = vsel %vm1711, %v1702, %v1718
    %v1720 = vsel %vm1710, %v1717, %v1719
    %v1721 = vsel %vm1709, %v1699, %v1702
    %v1722 = vsel %vm1712, %v1708, 1326507024
    %v1723 = vsel %vm1711, %v1705, %v1722
    %v1724 = vsel %vm1710, %v1721, %v1723
    %v1725 = vshll.u32 %v1685, 8
    %v1726 = vmul.u32.u64.compose %v1725, %v1724
    %v1727 = vextract.low.u32 %v1726
    %v1728 = vextract.high.u32 %v1726
    %v1729 = vmul.u32.u64.compose %v1725, %v1720
    %v1730 = vextract.low.u32 %v1729
    %v1731 = vextract.high.u32 %v1729
    %v1732 = vmul.u32 %v1725, %v1716
    %v1733 = vadd.s32 %v1728, %v1730
    %vm1734 = vc.u32 %v1728, %v1730
    %v1735 = vadd.s32 %v1731, 1
    %v1736 = vsel %vm1734, %v1735, %v1731
    %v1737 = vadd.s32 %v1732, %v1736
    %v1738 = vadd.s32 %v1737, 536870912
    %v1739 = vshrl.u32 %v1738, 30
    %v1740 = vshll.u32 %v1739, 30
    %v1741 = vsub.s32 %v1737, %v1740
    %vm1742 = vcmp.lt.s32.totalorder %v1741, 0
    %v1743 = vsub.s32 0, %v1741
    %v1744 = vsel %vm1742, %v1743, %v1741
    %v1745 = vclz %v1744
    %v1746 = vsub.s32 %v1745, 2
    %vm1747 = vcmp.gt.s32.totalorder 0, %v1746
    %v1748 = vsel %vm1747, 0, %v1746
    %v1749 = vsub.s32 32, %v1748
    %v1750 = vshll.u32 %v1741, %v1748
    %v1751 = vshrl.u32 %v1733, %v1749
    %v1752 = vor.u32 %v1750, %v1751
    %v1753 = vsub.s32 4294967266, %v1748
    %v1754 = vadd.s32 %v1753, 127
    %v1755 = vshll.u32 %v1754, 23
    %v1756 = vor.u32 4788187, %v1755
    %v1757 = vand.u32 2147483647, %v1756
    %v1759 = vcvt.s32.f32 %v1752
    %v1760 = vmul.f32 %v1759, %v1757
    %v1761 = vxor.u32 %v1760, 2147483648
    %v1762 = vsel %vm1679, %v1761, %v1760
    %v1763 = vsub.s32 4, %v1739
    %v1764 = vsel %vm1679, %v1763, %v1739
    %v1765 = vsel %vm1678, %v447, %v1762
    %v1766 = vsel %vm1678, 0, %v1764
    %v1767 = vcosq.f32.pop %v1765
    %v1768 = vsinq.f32.pop %v1765
    %vm1769 = vweird.f32 %v447
    %v1770 = vadd.s32 %v1766, 3
    %v1771 = vand.u32 %v1770, 3
    %vm1772 = vcmp.lt.s32.totalorder %v1771, 2
    %vm1773 = vcmp.eq.s32.totalorder %v1771, 0
    %v1774 = vxor.u32 %v1768, 2147483648
    %v1775 = vsel %vm1773, %v1767, %v1774
    %vm1776 = vcmp.eq.s32.totalorder %v1771, 2
    %v1777 = vxor.u32 %v1767, 2147483648
    %v1778 = vsel %vm1776, %v1777, %v1768
    %v1779 = vsel %vm1772, %v1775, %v1778
    %v1780 = vsel %vm1769, nan, %v1779
    %v1781 = vand.u32 2147483647, %v486
    %vm1782 = vcmp.le.f32.partialorder %v1781, 0.7853982
    %vm1783 = vcmp.lt.s32.totalorder %v486, 0
    %v1784 = vand.u32 %v486, 2139095040
    %v1785 = vshrl.u32 %v1784, 23
    %v1786 = vsub.s32 %v1785, 127
    %v1787 = vand.u32 2147483647, %v486
    %v1788 = vand.u32 %v1787, 8388607
    %v1789 = vor.u32 %v1788, 8388608
    %v1790 = vsub.s32 0, %v1789
    %v1791 = vadd.s32 %v1786, 1
    %vm1792 = vcmp.gt.s32.totalorder %v1791, 0
    %v1793 = vsel %vm1792, %v1791, 0
    %v1794 = vshrl.u32 %v1793, 5
    %v1795 = vand.u32 %v1793, 31
    %v1796 = vsub.s32 32, %v1795
    %v1797 = vshrl.u32 683565275, %v1796
    %v1798 = vshll.u32 683565275, %v1795
    %v1799 = vshrl.u32 2475754826, %v1796
    %v1800 = vor.u32 %v1798, %v1799
    %v1801 = vshll.u32 2475754826, %v1795
    %v1802 = vshrl.u32 2131351028, %v1796
    %v1803 = vor.u32 %v1801, %v1802
    %v1804 = vshll.u32 2131351028, %v1795
    %v1805 = vshrl.u32 2102212464, %v1796
    %v1806 = vor.u32 %v1804, %v1805
    %v1807 = vshll.u32 2102212464, %v1795
    %v1808 = vshrl.u32 920167782, %v1796
    %v1809 = vor.u32 %v1807, %v1808
    %v1810 = vshll.u32 920167782, %v1795
    %v1811 = vshrl.u32 1326507024, %v1796
    %v1812 = vor.u32 %v1810, %v1811
    %vm1813 = vcmp.lt.s32.totalorder %v1794, 1
    %vm1814 = vcmp.lt.s32.totalorder %v1794, 2
    %vm1815 = vcmp.lt.s32.totalorder %v1794, 3
    %vm1816 = vcmp.lt.s32.totalorder %v1794, 4
    %v1817 = vsel %vm1813, %v1797, %v1800
    %v1818 = vsel %vm1816, %v1806, 2102212464
    %v1819 = vsel %vm1815, %v1803, %v1818
    %v1820 = vsel %vm1814, %v1817, %v1819
    %v1821 = vsel %vm1813, %v1800, %v1803
    %v1822 = vsel %vm1816, %v1809, 920167782
    %v1823 = vsel %vm1815, %v1806, %v1822
    %v1824 = vsel %vm1814, %v1821, %v1823
    %v1825 = vsel %vm1813, %v1803, %v1806
    %v1826 = vsel %vm1816, %v1812, 1326507024
    %v1827 = vsel %vm1815, %v1809, %v1826
    %v1828 = vsel %vm1814, %v1825, %v1827
    %v1829 = vshll.u32 %v1789, 8
    %v1830 = vmul.u32.u64.compose %v1829, %v1828
    %v1831 = vextract.low.u32 %v1830
    %v1832 = vextract.high.u32 %v1830
    %v1833 = vmul.u32.u64.compose %v1829, %v1824
    %v1834 = vextract.low.u32 %v1833
    %v1835 = vextract.high.u32 %v1833
    %v1836 = vmul.u32 %v1829, %v1820
    %v1837 = vadd.s32 %v1832, %v1834
    %vm1838 = vc.u32 %v1832, %v1834
    %v1839 = vadd.s32 %v1835, 1
    %v1840 = vsel %vm1838, %v1839, %v1835
    %v1841 = vadd.s32 %v1836, %v1840
    %v1842 = vadd.s32 %v1841, 536870912
    %v1843 = vshrl.u32 %v1842, 30
    %v1844 = vshll.u32 %v1843, 30
    %v1845 = vsub.s32 %v1841, %v1844
    %vm1846 = vcmp.lt.s32.totalorder %v1845, 0
    %v1847 = vsub.s32 0, %v1845
    %v1848 = vsel %vm1846, %v1847, %v1845
    %v1849 = vclz %v1848
    %v1850 = vsub.s32 %v1849, 2
    %vm1851 = vcmp.gt.s32.totalorder 0, %v1850
    %v1852 = vsel %vm1851, 0, %v1850
    %v1853 = vsub.s32 32, %v1852
    %v1854 = vshll.u32 %v1845, %v1852
    %v1855 = vshrl.u32 %v1837, %v1853
    %v1856 = vor.u32 %v1854, %v1855
    %v1857 = vsub.s32 4294967266, %v1852
    %v1858 = vadd.s32 %v1857, 127
    %v1859 = vshll.u32 %v1858, 23
    %v1860 = vor.u32 4788187, %v1859
    %v1861 = vand.u32 2147483647, %v1860
    %v1863 = vcvt.s32.f32 %v1856
    %v1864 = vmul.f32 %v1863, %v1861
    %v1865 = vxor.u32 %v1864, 2147483648
    %v1866 = vsel %vm1783, %v1865, %v1864
    %v1867 = vsub.s32 4, %v1843
    %v1868 = vsel %vm1783, %v1867, %v1843
    %v1869 = vsel %vm1782, %v486, %v1866
    %v1870 = vsel %vm1782, 0, %v1868
    %v1871 = vcosq.f32.pop %v1869
    %v1872 = vsinq.f32.pop %v1869
    %vm1873 = vweird.f32 %v486
    %v1874 = vadd.s32 %v1870, 3
    %v1875 = vand.u32 %v1874, 3
    %vm1876 = vcmp.lt.s32.totalorder %v1875, 2
    %vm1877 = vcmp.eq.s32.totalorder %v1875, 0
    %v1878 = vxor.u32 %v1872, 2147483648
    %v1879 = vsel %vm1877, %v1871, %v1878
    %vm1880 = vcmp.eq.s32.totalorder %v1875, 2
    %v1881 = vxor.u32 %v1871, 2147483648
    %v1882 = vsel %vm1880, %v1881, %v1872
    %v1883 = vsel %vm1876, %v1879, %v1882
    %v1884 = vsel %vm1873, nan, %v1883
    %v1885 = vand.u32 2147483647, %v488
    %vm1886 = vcmp.le.f32.partialorder %v1885, 0.7853982
    %vm1887 = vcmp.lt.s32.totalorder %v488, 0
    %v1888 = vand.u32 %v488, 2139095040
    %v1889 = vshrl.u32 %v1888, 23
    %v1890 = vsub.s32 %v1889, 127
    %v1891 = vand.u32 2147483647, %v488
    %v1892 = vand.u32 %v1891, 8388607
    %v1893 = vor.u32 %v1892, 8388608
    %v1894 = vsub.s32 0, %v1893
    %v1895 = vadd.s32 %v1890, 1
    %vm1896 = vcmp.gt.s32.totalorder %v1895, 0
    %v1897 = vsel %vm1896, %v1895, 0
    %v1898 = vshrl.u32 %v1897, 5
    %v1899 = vand.u32 %v1897, 31
    %v1900 = vsub.s32 32, %v1899
    %v1901 = vshrl.u32 683565275, %v1900
    %v1902 = vshll.u32 683565275, %v1899
    %v1903 = vshrl.u32 2475754826, %v1900
    %v1904 = vor.u32 %v1902, %v1903
    %v1905 = vshll.u32 2475754826, %v1899
    %v1906 = vshrl.u32 2131351028, %v1900
    %v1907 = vor.u32 %v1905, %v1906
    %v1908 = vshll.u32 2131351028, %v1899
    %v1909 = vshrl.u32 2102212464, %v1900
    %v1910 = vor.u32 %v1908, %v1909
    %v1911 = vshll.u32 2102212464, %v1899
    %v1912 = vshrl.u32 920167782, %v1900
    %v1913 = vor.u32 %v1911, %v1912
    %v1914 = vshll.u32 920167782, %v1899
    %v1915 = vshrl.u32 1326507024, %v1900
    %v1916 = vor.u32 %v1914, %v1915
    %vm1917 = vcmp.lt.s32.totalorder %v1898, 1
    %vm1918 = vcmp.lt.s32.totalorder %v1898, 2
    %vm1919 = vcmp.lt.s32.totalorder %v1898, 3
    %vm1920 = vcmp.lt.s32.totalorder %v1898, 4
    %v1921 = vsel %vm1917, %v1901, %v1904
    %v1922 = vsel %vm1920, %v1910, 2102212464
    %v1923 = vsel %vm1919, %v1907, %v1922
    %v1924 = vsel %vm1918, %v1921, %v1923
    %v1925 = vsel %vm1917, %v1904, %v1907
    %v1926 = vsel %vm1920, %v1913, 920167782
    %v1927 = vsel %vm1919, %v1910, %v1926
    %v1928 = vsel %vm1918, %v1925, %v1927
    %v1929 = vsel %vm1917, %v1907, %v1910
    %v1930 = vsel %vm1920, %v1916, 1326507024
    %v1931 = vsel %vm1919, %v1913, %v1930
    %v1932 = vsel %vm1918, %v1929, %v1931
    %v1933 = vshll.u32 %v1893, 8
    %v1934 = vmul.u32.u64.compose %v1933, %v1932
    %v1935 = vextract.low.u32 %v1934
    %v1936 = vextract.high.u32 %v1934
    %v1937 = vmul.u32.u64.compose %v1933, %v1928
    %v1938 = vextract.low.u32 %v1937
    %v1939 = vextract.high.u32 %v1937
    %v1940 = vmul.u32 %v1933, %v1924
    %v1941 = vadd.s32 %v1936, %v1938
    %vm1942 = vc.u32 %v1936, %v1938
    %v1943 = vadd.s32 %v1939, 1
    %v1944 = vsel %vm1942, %v1943, %v1939
    %v1945 = vadd.s32 %v1940, %v1944
    %v1946 = vadd.s32 %v1945, 536870912
    %v1947 = vshrl.u32 %v1946, 30
    %v1948 = vshll.u32 %v1947, 30
    %v1949 = vsub.s32 %v1945, %v1948
    %vm1950 = vcmp.lt.s32.totalorder %v1949, 0
    %v1951 = vsub.s32 0, %v1949
    %v1952 = vsel %vm1950, %v1951, %v1949
    %v1953 = vclz %v1952
    %v1954 = vsub.s32 %v1953, 2
    %vm1955 = vcmp.gt.s32.totalorder 0, %v1954
    %v1956 = vsel %vm1955, 0, %v1954
    %v1957 = vsub.s32 32, %v1956
    %v1958 = vshll.u32 %v1949, %v1956
    %v1959 = vshrl.u32 %v1941, %v1957
    %v1960 = vor.u32 %v1958, %v1959
    %v1961 = vsub.s32 4294967266, %v1956
    %v1962 = vadd.s32 %v1961, 127
    %v1963 = vshll.u32 %v1962, 23
    %v1964 = vor.u32 4788187, %v1963
    %v1965 = vand.u32 2147483647, %v1964
    %v1967 = vcvt.s32.f32 %v1960
    %v1968 = vmul.f32 %v1967, %v1965
    %v1969 = vxor.u32 %v1968, 2147483648
    %v1970 = vsel %vm1887, %v1969, %v1968
    %v1971 = vsub.s32 4, %v1947
    %v1972 = vsel %vm1887, %v1971, %v1947
    %v1973 = vsel %vm1886, %v488, %v1970
    %v1974 = vsel %vm1886, 0, %v1972
    %v1975 = vcosq.f32.pop %v1973
    %v1976 = vsinq.f32.pop %v1973
    %vm1977 = vweird.f32 %v488
    %v1978 = vadd.s32 %v1974, 3
    %v1979 = vand.u32 %v1978, 3
    %vm1980 = vcmp.lt.s32.totalorder %v1979, 2
    %vm1981 = vcmp.eq.s32.totalorder %v1979, 0
    %v1982 = vxor.u32 %v1976, 2147483648
    %v1983 = vsel %vm1981, %v1975, %v1982
    %vm1984 = vcmp.eq.s32.totalorder %v1979, 2
    %v1985 = vxor.u32 %v1975, 2147483648
    %v1986 = vsel %vm1984, %v1985, %v1976
    %v1987 = vsel %vm1980, %v1983, %v1986
    %v1988 = vsel %vm1977, nan, %v1987
    %v1989 = vand.u32 2147483647, %v527
    %vm1990 = vcmp.le.f32.partialorder %v1989, 0.7853982
    %vm1991 = vcmp.lt.s32.totalorder %v527, 0
    %v1992 = vand.u32 %v527, 2139095040
    %v1993 = vshrl.u32 %v1992, 23
    %v1994 = vsub.s32 %v1993, 127
    %v1995 = vand.u32 2147483647, %v527
    %v1996 = vand.u32 %v1995, 8388607
    %v1997 = vor.u32 %v1996, 8388608
    %v1998 = vsub.s32 0, %v1997
    %v1999 = vadd.s32 %v1994, 1
    %vm2000 = vcmp.gt.s32.totalorder %v1999, 0
    %v2001 = vsel %vm2000, %v1999, 0
    %v2002 = vshrl.u32 %v2001, 5
    %v2003 = vand.u32 %v2001, 31
    %v2004 = vsub.s32 32, %v2003
    %v2005 = vshrl.u32 683565275, %v2004
    %v2006 = vshll.u32 683565275, %v2003
    %v2007 = vshrl.u32 2475754826, %v2004
    %v2008 = vor.u32 %v2006, %v2007
    %v2009 = vshll.u32 2475754826, %v2003
    %v2010 = vshrl.u32 2131351028, %v2004
    %v2011 = vor.u32 %v2009, %v2010
    %v2012 = vshll.u32 2131351028, %v2003
    %v2013 = vshrl.u32 2102212464, %v2004
    %v2014 = vor.u32 %v2012, %v2013
    %v2015 = vshll.u32 2102212464, %v2003
    %v2016 = vshrl.u32 920167782, %v2004
    %v2017 = vor.u32 %v2015, %v2016
    %v2018 = vshll.u32 920167782, %v2003
    %v2019 = vshrl.u32 1326507024, %v2004
    %v2020 = vor.u32 %v2018, %v2019
    %vm2021 = vcmp.lt.s32.totalorder %v2002, 1
    %vm2022 = vcmp.lt.s32.totalorder %v2002, 2
    %vm2023 = vcmp.lt.s32.totalorder %v2002, 3
    %vm2024 = vcmp.lt.s32.totalorder %v2002, 4
    %v2025 = vsel %vm2021, %v2005, %v2008
    %v2026 = vsel %vm2024, %v2014, 2102212464
    %v2027 = vsel %vm2023, %v2011, %v2026
    %v2028 = vsel %vm2022, %v2025, %v2027
    %v2029 = vsel %vm2021, %v2008, %v2011
    %v2030 = vsel %vm2024, %v2017, 920167782
    %v2031 = vsel %vm2023, %v2014, %v2030
    %v2032 = vsel %vm2022, %v2029, %v2031
    %v2033 = vsel %vm2021, %v2011, %v2014
    %v2034 = vsel %vm2024, %v2020, 1326507024
    %v2035 = vsel %vm2023, %v2017, %v2034
    %v2036 = vsel %vm2022, %v2033, %v2035
    %v2037 = vshll.u32 %v1997, 8
    %v2038 = vmul.u32.u64.compose %v2037, %v2036
    %v2039 = vextract.low.u32 %v2038
    %v2040 = vextract.high.u32 %v2038
    %v2041 = vmul.u32.u64.compose %v2037, %v2032
    %v2042 = vextract.low.u32 %v2041
    %v2043 = vextract.high.u32 %v2041
    %v2044 = vmul.u32 %v2037, %v2028
    %v2045 = vadd.s32 %v2040, %v2042
    %vm2046 = vc.u32 %v2040, %v2042
    %v2047 = vadd.s32 %v2043, 1
    %v2048 = vsel %vm2046, %v2047, %v2043
    %v2049 = vadd.s32 %v2044, %v2048
    %v2050 = vadd.s32 %v2049, 536870912
    %v2051 = vshrl.u32 %v2050, 30
    %v2052 = vshll.u32 %v2051, 30
    %v2053 = vsub.s32 %v2049, %v2052
    %vm2054 = vcmp.lt.s32.totalorder %v2053, 0
    %v2055 = vsub.s32 0, %v2053
    %v2056 = vsel %vm2054, %v2055, %v2053
    %v2057 = vclz %v2056
    %v2058 = vsub.s32 %v2057, 2
    %vm2059 = vcmp.gt.s32.totalorder 0, %v2058
    %v2060 = vsel %vm2059, 0, %v2058
    %v2061 = vsub.s32 32, %v2060
    %v2062 = vshll.u32 %v2053, %v2060
    %v2063 = vshrl.u32 %v2045, %v2061
    %v2064 = vor.u32 %v2062, %v2063
    %v2065 = vsub.s32 4294967266, %v2060
    %v2066 = vadd.s32 %v2065, 127
    %v2067 = vshll.u32 %v2066, 23
    %v2068 = vor.u32 4788187, %v2067
    %v2069 = vand.u32 2147483647, %v2068
    %v2071 = vcvt.s32.f32 %v2064
    %v2072 = vmul.f32 %v2071, %v2069
    %v2073 = vxor.u32 %v2072, 2147483648
    %v2074 = vsel %vm1991, %v2073, %v2072
    %v2075 = vsub.s32 4, %v2051
    %v2076 = vsel %vm1991, %v2075, %v2051
    %v2077 = vsel %vm1990, %v527, %v2074
    %v2078 = vsel %vm1990, 0, %v2076
    %v2079 = vcosq.f32.pop %v2077
    %v2080 = vsinq.f32.pop %v2077
    %vm2081 = vweird.f32 %v527
    %v2082 = vadd.s32 %v2078, 3
    %v2083 = vand.u32 %v2082, 3
    %vm2084 = vcmp.lt.s32.totalorder %v2083, 2
    %vm2085 = vcmp.eq.s32.totalorder %v2083, 0
    %v2086 = vxor.u32 %v2080, 2147483648
    %v2087 = vsel %vm2085, %v2079, %v2086
    %vm2088 = vcmp.eq.s32.totalorder %v2083, 2
    %v2089 = vxor.u32 %v2079, 2147483648
    %v2090 = vsel %vm2088, %v2089, %v2080
    %v2091 = vsel %vm2084, %v2087, %v2090
    %v2092 = vsel %vm2081, nan, %v2091
    %v2093 = vand.u32 2147483647, %v529
    %vm2094 = vcmp.le.f32.partialorder %v2093, 0.7853982
    %vm2095 = vcmp.lt.s32.totalorder %v529, 0
    %v2096 = vand.u32 %v529, 2139095040
    %v2097 = vshrl.u32 %v2096, 23
    %v2098 = vsub.s32 %v2097, 127
    %v2099 = vand.u32 2147483647, %v529
    %v2100 = vand.u32 %v2099, 8388607
    %v2101 = vor.u32 %v2100, 8388608
    %v2102 = vsub.s32 0, %v2101
    %v2103 = vadd.s32 %v2098, 1
    %vm2104 = vcmp.gt.s32.totalorder %v2103, 0
    %v2105 = vsel %vm2104, %v2103, 0
    %v2106 = vshrl.u32 %v2105, 5
    %v2107 = vand.u32 %v2105, 31
    %v2108 = vsub.s32 32, %v2107
    %v2109 = vshrl.u32 683565275, %v2108
    %v2110 = vshll.u32 683565275, %v2107
    %v2111 = vshrl.u32 2475754826, %v2108
    %v2112 = vor.u32 %v2110, %v2111
    %v2113 = vshll.u32 2475754826, %v2107
    %v2114 = vshrl.u32 2131351028, %v2108
    %v2115 = vor.u32 %v2113, %v2114
    %v2116 = vshll.u32 2131351028, %v2107
    %v2117 = vshrl.u32 2102212464, %v2108
    %v2118 = vor.u32 %v2116, %v2117
    %v2119 = vshll.u32 2102212464, %v2107
    %v2120 = vshrl.u32 920167782, %v2108
    %v2121 = vor.u32 %v2119, %v2120
    %v2122 = vshll.u32 920167782, %v2107
    %v2123 = vshrl.u32 1326507024, %v2108
    %v2124 = vor.u32 %v2122, %v2123
    %vm2125 = vcmp.lt.s32.totalorder %v2106, 1
    %vm2126 = vcmp.lt.s32.totalorder %v2106, 2
    %vm2127 = vcmp.lt.s32.totalorder %v2106, 3
    %vm2128 = vcmp.lt.s32.totalorder %v2106, 4
    %v2129 = vsel %vm2125, %v2109, %v2112
    %v2130 = vsel %vm2128, %v2118, 2102212464
    %v2131 = vsel %vm2127, %v2115, %v2130
    %v2132 = vsel %vm2126, %v2129, %v2131
    %v2133 = vsel %vm2125, %v2112, %v2115
    %v2134 = vsel %vm2128, %v2121, 920167782
    %v2135 = vsel %vm2127, %v2118, %v2134
    %v2136 = vsel %vm2126, %v2133, %v2135
    %v2137 = vsel %vm2125, %v2115, %v2118
    %v2138 = vsel %vm2128, %v2124, 1326507024
    %v2139 = vsel %vm2127, %v2121, %v2138
    %v2140 = vsel %vm2126, %v2137, %v2139
    %v2141 = vshll.u32 %v2101, 8
    %v2142 = vmul.u32.u64.compose %v2141, %v2140
    %v2143 = vextract.low.u32 %v2142
    %v2144 = vextract.high.u32 %v2142
    %v2145 = vmul.u32.u64.compose %v2141, %v2136
    %v2146 = vextract.low.u32 %v2145
    %v2147 = vextract.high.u32 %v2145
    %v2148 = vmul.u32 %v2141, %v2132
    %v2149 = vadd.s32 %v2144, %v2146
    %vm2150 = vc.u32 %v2144, %v2146
    %v2151 = vadd.s32 %v2147, 1
    %v2152 = vsel %vm2150, %v2151, %v2147
    %v2153 = vadd.s32 %v2148, %v2152
    %v2154 = vadd.s32 %v2153, 536870912
    %v2155 = vshrl.u32 %v2154, 30
    %v2156 = vshll.u32 %v2155, 30
    %v2157 = vsub.s32 %v2153, %v2156
    %vm2158 = vcmp.lt.s32.totalorder %v2157, 0
    %v2159 = vsub.s32 0, %v2157
    %v2160 = vsel %vm2158, %v2159, %v2157
    %v2161 = vclz %v2160
    %v2162 = vsub.s32 %v2161, 2
    %vm2163 = vcmp.gt.s32.totalorder 0, %v2162
    %v2164 = vsel %vm2163, 0, %v2162
    %v2165 = vsub.s32 32, %v2164
    %v2166 = vshll.u32 %v2157, %v2164
    %v2167 = vshrl.u32 %v2149, %v2165
    %v2168 = vor.u32 %v2166, %v2167
    %v2169 = vsub.s32 4294967266, %v2164
    %v2170 = vadd.s32 %v2169, 127
    %v2171 = vshll.u32 %v2170, 23
    %v2172 = vor.u32 4788187, %v2171
    %v2173 = vand.u32 2147483647, %v2172
    %v2175 = vcvt.s32.f32 %v2168
    %v2176 = vmul.f32 %v2175, %v2173
    %v2177 = vxor.u32 %v2176, 2147483648
    %v2178 = vsel %vm2095, %v2177, %v2176
    %v2179 = vsub.s32 4, %v2155
    %v2180 = vsel %vm2095, %v2179, %v2155
    %v2181 = vsel %vm2094, %v529, %v2178
    %v2182 = vsel %vm2094, 0, %v2180
    %v2183 = vcosq.f32.pop %v2181
    %v2184 = vsinq.f32.pop %v2181
    %vm2185 = vweird.f32 %v529
    %v2186 = vadd.s32 %v2182, 3
    %v2187 = vand.u32 %v2186, 3
    %vm2188 = vcmp.lt.s32.totalorder %v2187, 2
    %vm2189 = vcmp.eq.s32.totalorder %v2187, 0
    %v2190 = vxor.u32 %v2184, 2147483648
    %v2191 = vsel %vm2189, %v2183, %v2190
    %vm2192 = vcmp.eq.s32.totalorder %v2187, 2
    %v2193 = vxor.u32 %v2183, 2147483648
    %v2194 = vsel %vm2192, %v2193, %v2184
    %v2195 = vsel %vm2188, %v2191, %v2194
    %v2196 = vsel %vm2185, nan, %v2195
    %v2197 = vld [vmem:[%s3] sm:$0x1]
    %v2198 = vld [vmem:[%s3 + $0x1] sm:$0x1]
    %v2199 = vlaneseq
    %v2200 = vshrl.u32 %v2199, 7
    %v2201 = vsub.s32 0, %v2200
    %v2202 = vrot.slane %v2197, %v2201
    %v2203 = vmul.f32 %v636, %v2202
    %vm2204 = vcmask 1041408
    %v2205 = vsel %vm2204, %v2203, 0.0
    %2206 = vadd.xlane.f32.xlu0 %v2205
    %v2207 = vpop.xlane.xlu0 %2206
    %v2208 = vlaneseq
    %v2209 = vshrl.u32 %v2208, 7
    %v2210 = vsub.s32 0, %v2209
    %v2211 = vrot.slane %v2198, %v2210
    %v2212 = vadd.f32 %v2207, %v2211
    %vm2213 = vcmask 1024
    %2214 = vst.msk [vmem:[#allocation2] sm:$0x3] %vm2213, %v2212
    %v2215 = vmul.f32 %v740, %v2202
    %v2216 = vsel %vm2204, %v2215, 0.0
    %2217 = vadd.xlane.f32.xlu0 %v2216
    %v2218 = vpop.xlane.xlu0 %2217
    %v2219 = vadd.f32 %v2218, %v2211
    %2221 = vrot.lane.b32.xlu0 %v2219, 1
    %v2222 = vpop.permute.xlu0 %2221
    %vm2224 = vcmask 9224
    %2225 = vst.msk [vmem:[#allocation2] sm:$0x3] %vm2224, %v2222
    %v2226 = vmul.f32 %v844, %v2202
    %v2227 = vsel %vm2204, %v2226, 0.0
    %2228 = vadd.xlane.f32.xlu0 %v2227
    %v2229 = vpop.xlane.xlu0 %2228
    %v2230 = vadd.f32 %v2229, %v2211
    %2232 = vrot.lane.b32.xlu0 %v2230, 2
    %v2233 = vpop.permute.xlu0 %2232
    %vm2235 = vcmask 17424
    %2236 = vst.msk [vmem:[#allocation2] sm:$0x3] %vm2235, %v2233
    %v2237 = vmul.f32 %v948, %v2202
    %v2238 = vsel %vm2204, %v2237, 0.0
    %2239 = vadd.xlane.f32.xlu0 %v2238
    %v2240 = vpop.xlane.xlu0 %2239
    %v2241 = vadd.f32 %v2240, %v2211
    %2243 = vrot.lane.b32.xlu0 %v2241, 3
    %v2244 = vpop.permute.xlu0 %2243
    %vm2246 = vcmask 25624
    %2247 = vst.msk [vmem:[#allocation2] sm:$0x3] %vm2246, %v2244
    %v2248 = vmul.f32 %v1052, %v2202
    %v2249 = vsel %vm2204, %v2248, 0.0
    %2250 = vadd.xlane.f32.xlu0 %v2249
    %v2251 = vpop.xlane.xlu0 %2250
    %v2252 = vadd.f32 %v2251, %v2211
    %2254 = vrot.lane.b32.xlu0 %v2252, 4
    %v2255 = vpop.permute.xlu0 %2254
    %vm2257 = vcmask 33824
    %2258 = vst.msk [vmem:[#allocation2] sm:$0x3] %vm2257, %v2255
    %v2259 = vmul.f32 %v1156, %v2202
    %v2260 = vsel %vm2204, %v2259, 0.0
    %2261 = vadd.xlane.f32.xlu0 %v2260
    %v2262 = vpop.xlane.xlu0 %2261
    %v2263 = vadd.f32 %v2262, %v2211
    %2265 = vrot.lane.b32.xlu0 %v2263, 5
    %v2266 = vpop.permute.xlu0 %2265
    %vm2268 = vcmask 42024
    %2269 = vst.msk [vmem:[#allocation2] sm:$0x3] %vm2268, %v2266
    %v2270 = vmul.f32 %v1260, %v2202
    %v2271 = vsel %vm2204, %v2270, 0.0
    %2272 = vadd.xlane.f32.xlu0 %v2271
    %v2273 = vpop.xlane.xlu0 %2272
    %v2274 = vadd.f32 %v2273, %v2211
    %2276 = vrot.lane.b32.xlu0 %v2274, 6
    %v2277 = vpop.permute.xlu0 %2276
    %vm2279 = vcmask 50224
    %2280 = vst.msk [vmem:[#allocation2] sm:$0x3] %vm2279, %v2277
    %v2281 = vmul.f32 %v1364, %v2202
    %v2282 = vsel %vm2204, %v2281, 0.0
    %2283 = vadd.xlane.f32.xlu0 %v2282
    %v2284 = vpop.xlane.xlu0 %2283
    %v2285 = vadd.f32 %v2284, %v2211
    %2287 = vrot.lane.b32.xlu0 %v2285, 7
    %v2288 = vpop.permute.xlu0 %2287
    %vm2290 = vcmask 58424
    %2291 = vst.msk [vmem:[#allocation2] sm:$0x3] %vm2290, %v2288
    %v2292 = vmul.f32 %v1468, %v2202
    %v2293 = vsel %vm2204, %v2292, 0.0
    %2294 = vadd.xlane.f32.xlu0 %v2293
    %v2295 = vpop.xlane.xlu0 %2294
    %v2296 = vadd.f32 %v2295, %v2211
    %2298 = vrot.lane.b32.xlu0 %v2296, 8
    %v2299 = vpop.permute.xlu0 %2298
    %vm2301 = vcmask 66624
    %2302 = vst.msk [vmem:[#allocation2] sm:$0x3] %vm2301, %v2299
    %v2303 = vmul.f32 %v1572, %v2202
    %v2304 = vsel %vm2204, %v2303, 0.0
    %2305 = vadd.xlane.f32.xlu0 %v2304
    %v2306 = vpop.xlane.xlu0 %2305
    %v2307 = vadd.f32 %v2306, %v2211
    %2309 = vrot.lane.b32.xlu0 %v2307, 9
    %v2310 = vpop.permute.xlu0 %2309
    %vm2312 = vcmask 74824
    %2313 = vst.msk [vmem:[#allocation2] sm:$0x3] %vm2312, %v2310
    %v2314 = vmul.f32 %v1676, %v2202
    %v2315 = vsel %vm2204, %v2314, 0.0
    %2316 = vadd.xlane.f32.xlu0 %v2315
    %v2317 = vpop.xlane.xlu0 %2316
    %v2318 = vadd.f32 %v2317, %v2211
    %2320 = vrot.lane.b32.xlu0 %v2318, 10
    %v2321 = vpop.permute.xlu0 %2320
    %vm2323 = vcmask 83024
    %2324 = vst.msk [vmem:[#allocation2] sm:$0x3] %vm2323, %v2321
    %v2325 = vmul.f32 %v1780, %v2202
    %v2326 = vsel %vm2204, %v2325, 0.0
    %2327 = vadd.xlane.f32.xlu0 %v2326
    %v2328 = vpop.xlane.xlu0 %2327
    %v2329 = vadd.f32 %v2328, %v2211
    %2331 = vrot.lane.b32.xlu0 %v2329, 11
    %v2332 = vpop.permute.xlu0 %2331
    %vm2334 = vcmask 91224
    %2335 = vst.msk [vmem:[#allocation2] sm:$0x3] %vm2334, %v2332
    %v2336 = vmul.f32 %v1884, %v2202
    %v2337 = vsel %vm2204, %v2336, 0.0
    %2338 = vadd.xlane.f32.xlu0 %v2337
    %v2339 = vpop.xlane.xlu0 %2338
    %v2340 = vadd.f32 %v2339, %v2211
    %2342 = vrot.lane.b32.xlu0 %v2340, 12
    %v2343 = vpop.permute.xlu0 %2342
    %vm2345 = vcmask 99424
    %2346 = vst.msk [vmem:[#allocation2] sm:$0x3] %vm2345, %v2343
    %v2347 = vmul.f32 %v1988, %v2202
    %v2348 = vsel %vm2204, %v2347, 0.0
    %2349 = vadd.xlane.f32.xlu0 %v2348
    %v2350 = vpop.xlane.xlu0 %2349
    %v2351 = vadd.f32 %v2350, %v2211
    %2353 = vrot.lane.b32.xlu0 %v2351, 13
    %v2354 = vpop.permute.xlu0 %2353
    %vm2356 = vcmask 107624
    %2357 = vst.msk [vmem:[#allocation2] sm:$0x3] %vm2356, %v2354
    %v2358 = vmul.f32 %v2092, %v2202
    %v2359 = vsel %vm2204, %v2358, 0.0
    %2360 = vadd.xlane.f32.xlu0 %v2359
    %v2361 = vpop.xlane.xlu0 %2360
    %v2362 = vadd.f32 %v2361, %v2211
    %2364 = vrot.lane.b32.xlu0 %v2362, 14
    %v2365 = vpop.permute.xlu0 %2364
    %vm2367 = vcmask 115824
    %2368 = vst.msk [vmem:[#allocation2] sm:$0x3] %vm2367, %v2365
    %v2369 = vmul.f32 %v2196, %v2202
    %v2370 = vsel %vm2204, %v2369, 0.0
    %2371 = vadd.xlane.f32.xlu0 %v2370
    %v2372 = vpop.xlane.xlu0 %2371
    %v2373 = vadd.f32 %v2372, %v2211
    %2375 = vrot.lane.b32.xlu0 %v2373, 15
    %v2376 = vpop.permute.xlu0 %2375
    %vm2378 = vcmask 124024
    %2379 = vst.msk [vmem:[#allocation2] sm:$0x3] %vm2378, %v2376
    // Predicated region
    $region18: #{_lambda_.1} parent=1 // pred_check
      _
    $region19: #{_lambda_.1} parent=1 // pred_check_branch
      %2381 = sbr.rel (0) target = $region21
    $region20: #{_lambda_.1} parent=1 // pred_region
      %s2383 = ssub.s32 32, 32
      %2384 = vsyncadd [#allocation3], %s2383
      %s2386 = sshll.u32 [#allocation2], 4
      %s2387 = int_to_ptr.vmem [resolvable:$true] %s2386
      %2389 = dma.vmem_to_hbm [thread:$0]  %s2387, 32, %s4, [#allocation3]
    $region21: #{_lambda_.1} parent=1 // pred_fallthru
      _
    // Predicated region
    $region22: #{_lambda_.1} parent=1 // pred_check
      _
    $region23: #{_lambda_.1} parent=1 // pred_check_branch
      %2391 = sbr.rel (0) target = $region25
    $region24: #{_lambda_.1} parent=1 // pred_region
      %2392 = dma.done [#allocation3], 32
    $region25: #{_lambda_.1} parent=1 // pred_fallthru
      _
    %2393 = vsyncpa [#allocation3], 1

</llo_original>
